<compile_context>
chip_gen: v7x
topology: tpu7x:2x2x1
jax: 0.10.0
libtpu: 0.0.40
codegen_flags: <defaults>
</compile_context>

<pallas_src>
import numpy as np

import jax
import jax.numpy as jnp
from jax.experimental import pallas as pl
from jax.experimental.pallas import tpu as pltpu


LAYER_DIMS = (256, 512, 1024)  # hidden widths of the generator MLP
MAX_TILE_B = 1024              # largest batch tile (fits comfortably in VMEM)


# ---------------------------------------------------------------------------
# Kernel
# ---------------------------------------------------------------------------
def make_generator_kernel(num_sub, bf16_act):
    """Build the fused 4-layer MLP kernel.

    num_sub:  number of independent M sub-blocks inside one batch tile
              (unrolled so one sub-block's MXU work hides the other's VPU
              epilogue).
    bf16_act: do the ReLU in bf16 after the f32->bf16 downcast (v6e/v7x);
              identical numerics since max(x,0) commutes with the downcast.
    """

    def dense(h_bf16, w_ref, b_ref):
        # bf16 x bf16 on the MXU, f32 accumulation, f32 bias add.
        acc = jnp.dot(h_bf16, w_ref[...], preferred_element_type=jnp.float32)
        return acc + b_ref[...]

    def relu_to_bf16(acc_f32):
        if bf16_act:
            # downcast first, ReLU on half-width elements (v6e/v7x bf16 VPU)
            return jnp.maximum(acc_f32.astype(jnp.bfloat16), 0.0)
        # v5e: ReLU in f32, cast for the next MXU operand
        return jnp.maximum(acc_f32, 0.0).astype(jnp.bfloat16)

    def kernel(x_ref,
               w1_ref, b1_ref,
               w2_ref, b2_ref,
               w3_ref, b3_ref,
               w4_ref, b4_ref,
               o_ref):
        tile_b = x_ref.shape[0]
        sub = tile_b // num_sub
        # Static (unrolled) loop over independent row sub-blocks.
        for s in range(num_sub):
            rows = pl.ds(s * sub, sub)
            h = x_ref[rows, :]                      # already bf16
            h = relu_to_bf16(dense(h, w1_ref, b1_ref))
            h = relu_to_bf16(dense(h, w2_ref, b2_ref))
            h = relu_to_bf16(dense(h, w3_ref, b3_ref))
            y = jnp.tanh(dense(h, w4_ref, b4_ref))  # tanh in f32 on the EUP
            o_ref[rows, :] = y.astype(o_ref.dtype)

    return kernel


# ---------------------------------------------------------------------------
# Tiling / spec helpers
# ---------------------------------------------------------------------------
def _device_kind():
    try:
        return jax.devices()[0].device_kind.lower()
    except Exception:  # pragma: no cover - non-TPU / odd backends
        return ""


def _plan_tiling(batch):
    """Return (B_pad, tile_b).  B_pad is a multiple of tile_b and of 16."""
    kind = _device_kind()
    two_cores = "v7" in kind  # v7x: 2 TensorCores per chip

    b_pad = max(16, pl.cdiv(batch, 16) * 16)  # bf16 sublane packing (16 rows/vreg)

    if two_cores and b_pad >= 2 * 512:
        # Enough work to amortize each core's duplicated resident-weight DMA:
        # force an even number of >= 2 parallel grid steps so both TCs run.
        n_steps = max(2, 2 * pl.cdiv(b_pad, 2 * MAX_TILE_B))
        tile_b = pl.cdiv(pl.cdiv(b_pad, n_steps), 16) * 16
        b_pad = n_steps * tile_b
        return b_pad, tile_b

    if b_pad <= MAX_TILE_B:
        return b_pad, b_pad  # single grid step, no per-step overhead

    tile_b = MAX_TILE_B
    b_pad = pl.cdiv(b_pad, tile_b) * tile_b
    return b_pad, tile_b


def _build_specs(tile_b, input_dim, output_dim, param_shapes, resident_weights):
    if resident_weights:
        # Constant index_map + single buffer: weights/biases stay resident in
        # VMEM across grid steps (no 2x VMEM for double-buffering something
        # that never changes).
        def w_spec(shape):
            return pl.BlockSpec(shape, lambda i: (0, 0),
                                pipeline_mode=pl.Buffered(1))
    else:
        def w_spec(shape):
            return pl.BlockSpec(shape, lambda i: (0, 0))

    in_specs = [pl.BlockSpec((tile_b, input_dim), lambda i: (i, 0))]  # x tile
    for name in ("w1", "b1", "w2", "b2", "w3", "b3", "w4", "b4"):
        in_specs.append(w_spec(param_shapes[name]))
    out_spec = pl.BlockSpec((tile_b, output_dim), lambda i: (i, 0))
    return in_specs, out_spec


# Narrow fallback exceptions for JAX versions rejecting pl.Buffered(1)
# (do NOT blanket-catch: real kernel errors must surface).
_FALLBACK_ERRORS = (TypeError, ValueError, NotImplementedError)
if hasattr(pltpu, "LoweringException"):
    _FALLBACK_ERRORS = _FALLBACK_ERRORS + (pltpu.LoweringException,)


def _generator_pallas(x_bf16, params, tile_b, out_dtype, resident_weights,
                      bf16_act):
    B, input_dim = x_bf16.shape
    output_dim = params["w4"].shape[1]
    param_shapes = {k: v.shape for k, v in params.items()}

    in_specs, out_spec = _build_specs(tile_b, input_dim, output_dim,
                                      param_shapes, resident_weights)

    # Split each batch tile into 2 independent sub-blocks when it's big enough
    # so the MXU work of one hides the VPU epilogue of the other.
    num_sub = 2 if (tile_b >= 256 and tile_b % 32 == 0) else 1
    kernel = make_generator_kernel(num_sub, bf16_act)

    dims = (input_dim,) + LAYER_DIMS + (output_dim,)
    macs = sum(dims[i] * dims[i + 1] for i in range(4))
    param_bytes = sum(int(v.size) * v.dtype.itemsize for v in params.values())
    cost = pl.CostEstimate(
        flops=2 * B * macs,
        transcendentals=B * output_dim,
        bytes_accessed=int(x_bf16.size) * x_bf16.dtype.itemsize
        + param_bytes
        + B * output_dim * np.dtype(out_dtype).itemsize,
    )

    return pl.pallas_call(
        kernel,
        out_shape=jax.ShapeDtypeStruct((B, output_dim), out_dtype),
        grid_spec=pltpu.PrefetchScalarGridSpec(
            num_scalar_prefetch=0,
            grid=(B // tile_b,),
            in_specs=in_specs,
            out_specs=out_spec,
        ),
        compiler_params=pltpu.CompilerParams(
            dimension_semantics=("parallel",),
            # ~3.2 MB resident weights + f32 intermediates at tile_b=1024
            # (~20 MiB) + double-buffered x/out tiles; 40 MiB leaves headroom
            # on every chip (v7x physical VMEM/TC = 64 MiB).
            vmem_limit_bytes=40 << 20,
        ),
        cost_estimate=cost,
    )(x_bf16,
      params["w1"], params["b1"],
      params["w2"], params["b2"],
      params["w3"], params["b3"],
      params["w4"], params["b4"])


# ---------------------------------------------------------------------------
# Public wrapper
# ---------------------------------------------------------------------------
def generator_forward(x, params, *, tile_b=None, out_dtype=None):
    """x: (B, input_dim).  params: dict of w1..w4 (bf16, (in,out)), b1..b4 (f32, (1,out))."""
    B, _ = x.shape
    if out_dtype is None:
        out_dtype = x.dtype  # caller may pass jnp.bfloat16 to halve writeback

    kind = _device_kind()
    bf16_act = "v5" not in kind  # v5e has no bf16 VPU

    # --- lane-dense output: pad output_dim up to a multiple of 128 ----------
    output_dim = params["w4"].shape[1]
    out_pad = pl.cdiv(output_dim, 128) * 128
    if out_pad != output_dim:
        pad_n = out_pad - output_dim
        params = dict(params,
                      w4=jnp.pad(params["w4"], ((0, 0), (0, pad_n))),
                      b4=jnp.pad(params["b4"], ((0, 0), (0, pad_n))))

    # --- batch tiling / padding ---------------------------------------------
    if tile_b is None:
        B_pad, tile_b = _plan_tiling(B)
    else:
        tile_b = max(16, min(tile_b, MAX_TILE_B))
        tile_b = pl.cdiv(tile_b, 16) * 16
        B_pad = pl.cdiv(max(B, 16), tile_b) * tile_b

    # bf16 input: halves the per-step x DMA and drops the in-kernel cast.
    x_bf16 = x.astype(jnp.bfloat16)
    if B_pad != B:
        x_bf16 = jnp.pad(x_bf16, ((0, B_pad - B), (0, 0)))

    try:
        out = _generator_pallas(x_bf16, params, tile_b, out_dtype,
                                resident_weights=True, bf16_act=bf16_act)
    except _FALLBACK_ERRORS:
        # Only for JAX versions rejecting pl.Buffered(1) on constant-index
        # operands: fall back to default double-buffering (constant index_map
        # still avoids re-DMA of unchanged blocks).
        out = _generator_pallas(x_bf16, params, tile_b, out_dtype,
                                resident_weights=False, bf16_act=bf16_act)

    if B_pad != B:
        out = out[:B]
    if out_pad != output_dim:
        out = out[:, :output_dim]
    return out


# ---------------------------------------------------------------------------
# Params + pure-JAX reference
# ---------------------------------------------------------------------------
def init_params(key, input_dim, output_dim):
    """Deterministic synthetic init (PyTorch-style uniform(-1/sqrt(fan_in), +))."""
    dims = (input_dim,) + LAYER_DIMS + (output_dim,)
    params = {}
    for li in range(4):
        fan_in, fan_out = dims[li], dims[li + 1]
        key, kw, kb = jax.random.split(key, 3)
        bound = 1.0 / jnp.sqrt(fan_in)
        # Weights stored (in, out) == transpose of PyTorch's (out, in); bf16
        # halves weight HBM traffic and uses the native bf16 MXU path.
        params[f"w{li + 1}"] = jax.random.uniform(
            kw, (fan_in, fan_out), jnp.float32, -bound, bound).astype(jnp.bfloat16)
        # Biases stay f32 (added after f32 accumulation); 2D (1, out) layout.
        params[f"b{li + 1}"] = jax.random.uniform(
            kb, (1, fan_out), jnp.float32, -bound, bound)
    return params


def reference_forward(x, params):
    """Pure-JAX reference using the same bf16-operand / f32-accumulate math."""
    h = x.astype(jnp.float32)
    for li in (1, 2, 3):
        h = jnp.dot(h.astype(jnp.bfloat16), params[f"w{li}"],
                    preferred_element_type=jnp.float32) + params[f"b{li}"]
        h = jnp.maximum(h, 0.0)
    h = jnp.dot(h.astype(jnp.bfloat16), params["w4"],
                preferred_element_type=jnp.float32) + params["b4"]
    return jnp.tanh(h)


# ---------------------------------------------------------------------------
if __name__ == "__main__":
    key = jax.random.PRNGKey(0)
    key, kx = jax.random.split(key)

    batch, input_dim, output_dim = 16, 64, 128
    x = jax.random.normal(kx, (batch, input_dim), jnp.float32)
    params = init_params(key, input_dim, output_dim)

    out = generator_forward(x, params)
    out = jax.block_until_ready(out)

    ref = reference_forward(x, params)
    assert out.shape == (batch, output_dim), out.shape
    assert out.dtype == jnp.float32, out.dtype
    max_err = float(jnp.max(jnp.abs(out - ref)))
    assert jnp.allclose(out, ref, atol=2e-3, rtol=2e-3), max_err

    print("KERNEL_OK")
</pallas_src>

<mosaic_0001>
module attributes {stable_mosaic.version = 11 : i64} {
  func.func @kernel(%arg0: i32, %arg1: memref<16x64xbf16, #tpu.memory_space<vmem>>, %arg2: memref<64x256xbf16, #tpu.memory_space<vmem>>, %arg3: memref<1x256xf32, #tpu.memory_space<vmem>>, %arg4: memref<256x512xbf16, #tpu.memory_space<vmem>>, %arg5: memref<1x512xf32, #tpu.memory_space<vmem>>, %arg6: memref<512x1024xbf16, #tpu.memory_space<vmem>>, %arg7: memref<1x1024xf32, #tpu.memory_space<vmem>>, %arg8: memref<1024x128xbf16, #tpu.memory_space<vmem>>, %arg9: memref<1x128xf32, #tpu.memory_space<vmem>>, %arg10: memref<16x128xf32, #tpu.memory_space<vmem>>) attributes {dimension_semantics = [#tpu.dimension_semantics<parallel>], iteration_bounds = array<i64: 1>, scalar_prefetch = 0 : i64, scratch_operands = 0 : i64, tpu.core_type = #tpu.core_type<tc>, window_params = [{transform_indices = @transform_0, window_bounds = array<i64: 16, 64>}, {pipeline_mode = #tpu.pipeline_mode<synchronous>, transform_indices = @transform_1, window_bounds = array<i64: 64, 256>}, {pipeline_mode = #tpu.pipeline_mode<synchronous>, transform_indices = @transform_2, window_bounds = array<i64: 1, 256>}, {pipeline_mode = #tpu.pipeline_mode<synchronous>, transform_indices = @transform_3, window_bounds = array<i64: 256, 512>}, {pipeline_mode = #tpu.pipeline_mode<synchronous>, transform_indices = @transform_4, window_bounds = array<i64: 1, 512>}, {pipeline_mode = #tpu.pipeline_mode<synchronous>, transform_indices = @transform_5, window_bounds = array<i64: 512, 1024>}, {pipeline_mode = #tpu.pipeline_mode<synchronous>, transform_indices = @transform_6, window_bounds = array<i64: 1, 1024>}, {pipeline_mode = #tpu.pipeline_mode<synchronous>, transform_indices = @transform_7, window_bounds = array<i64: 1024, 128>}, {pipeline_mode = #tpu.pipeline_mode<synchronous>, transform_indices = @transform_8, window_bounds = array<i64: 1, 128>}, {transform_indices = @transform_9, window_bounds = array<i64: 16, 128>}]} {
    %c0 = arith.constant 0 : index
    %c0_0 = arith.constant 0 : index
    %0 = vector.load %arg1[%c0, %c0_0] : memref<16x64xbf16, #tpu.memory_space<vmem>>, vector<16x64xbf16>
    %c0_1 = arith.constant 0 : index
    %c0_2 = arith.constant 0 : index
    %1 = vector.load %arg2[%c0_1, %c0_2] : memref<64x256xbf16, #tpu.memory_space<vmem>>, vector<64x256xbf16>
    %cst = arith.constant dense<0.000000e+00> : vector<16x256xf32>
    %2 = tpu.matmul %0, %1, %cst {dimension_numbers = #tpu.dot_dimension_numbers<[1], [0], [0], [1], [0, 0, 1, 1], [], []>} : vector<16x64xbf16>, vector<64x256xbf16>, vector<16x256xf32> -> vector<16x256xf32>
    %c0_3 = arith.constant 0 : index
    %c0_4 = arith.constant 0 : index
    %3 = vector.load %arg3[%c0_3, %c0_4] : memref<1x256xf32, #tpu.memory_space<vmem>>, vector<1x256xf32>
    %4 = vector.broadcast %3 : vector<1x256xf32> to vector<16x256xf32>
    %5 = arith.addf %2, %4 : vector<16x256xf32>
    %6 = arith.truncf %5 : vector<16x256xf32> to vector<16x256xbf16>
    %cst_5 = arith.constant 0.000000e+00 : bf16
    %7 = vector.broadcast %cst_5 : bf16 to vector<16x256xbf16>
    %8 = arith.maximumf %6, %7 : vector<16x256xbf16>
    %c0_6 = arith.constant 0 : index
    %c0_7 = arith.constant 0 : index
    %9 = vector.load %arg4[%c0_6, %c0_7] : memref<256x512xbf16, #tpu.memory_space<vmem>>, vector<256x512xbf16>
    %cst_8 = arith.constant dense<0.000000e+00> : vector<16x512xf32>
    %10 = tpu.matmul %8, %9, %cst_8 {dimension_numbers = #tpu.dot_dimension_numbers<[1], [0], [0], [1], [0, 0, 1, 1], [], []>} : vector<16x256xbf16>, vector<256x512xbf16>, vector<16x512xf32> -> vector<16x512xf32>
    %c0_9 = arith.constant 0 : index
    %c0_10 = arith.constant 0 : index
    %11 = vector.load %arg5[%c0_9, %c0_10] : memref<1x512xf32, #tpu.memory_space<vmem>>, vector<1x512xf32>
    %12 = vector.broadcast %11 : vector<1x512xf32> to vector<16x512xf32>
    %13 = arith.addf %10, %12 : vector<16x512xf32>
    %14 = arith.truncf %13 : vector<16x512xf32> to vector<16x512xbf16>
    %cst_11 = arith.constant 0.000000e+00 : bf16
    %15 = vector.broadcast %cst_11 : bf16 to vector<16x512xbf16>
    %16 = arith.maximumf %14, %15 : vector<16x512xbf16>
    %c0_12 = arith.constant 0 : index
    %c0_13 = arith.constant 0 : index
    %17 = vector.load %arg6[%c0_12, %c0_13] : memref<512x1024xbf16, #tpu.memory_space<vmem>>, vector<512x1024xbf16>
    %cst_14 = arith.constant dense<0.000000e+00> : vector<16x1024xf32>
    %18 = tpu.matmul %16, %17, %cst_14 {dimension_numbers = #tpu.dot_dimension_numbers<[1], [0], [0], [1], [0, 0, 1, 1], [], []>} : vector<16x512xbf16>, vector<512x1024xbf16>, vector<16x1024xf32> -> vector<16x1024xf32>
    %c0_15 = arith.constant 0 : index
    %c0_16 = arith.constant 0 : index
    %19 = vector.load %arg7[%c0_15, %c0_16] : memref<1x1024xf32, #tpu.memory_space<vmem>>, vector<1x1024xf32>
    %20 = vector.broadcast %19 : vector<1x1024xf32> to vector<16x1024xf32>
    %21 = arith.addf %18, %20 : vector<16x1024xf32>
    %22 = arith.truncf %21 : vector<16x1024xf32> to vector<16x1024xbf16>
    %cst_17 = arith.constant 0.000000e+00 : bf16
    %23 = vector.broadcast %cst_17 : bf16 to vector<16x1024xbf16>
    %24 = arith.maximumf %22, %23 : vector<16x1024xbf16>
    %c0_18 = arith.constant 0 : index
    %c0_19 = arith.constant 0 : index
    %25 = vector.load %arg8[%c0_18, %c0_19] : memref<1024x128xbf16, #tpu.memory_space<vmem>>, vector<1024x128xbf16>
    %cst_20 = arith.constant dense<0.000000e+00> : vector<16x128xf32>
    %26 = tpu.matmul %24, %25, %cst_20 {dimension_numbers = #tpu.dot_dimension_numbers<[1], [0], [0], [1], [0, 0, 1, 1], [], []>} : vector<16x1024xbf16>, vector<1024x128xbf16>, vector<16x128xf32> -> vector<16x128xf32>
    %c0_21 = arith.constant 0 : index
    %c0_22 = arith.constant 0 : index
    %27 = vector.load %arg9[%c0_21, %c0_22] : memref<1x128xf32, #tpu.memory_space<vmem>>, vector<1x128xf32>
    %28 = vector.broadcast %27 : vector<1x128xf32> to vector<16x128xf32>
    %29 = arith.addf %26, %28 : vector<16x128xf32>
    %30 = math.tanh %29 : vector<16x128xf32>
    %c0_23 = arith.constant 0 : index
    %c0_24 = arith.constant 0 : index
    %31 = vector.load %arg10[%c0_23, %c0_24] : memref<16x128xf32, #tpu.memory_space<vmem>>, vector<16x128xf32>
    tpu.vector_store %arg10[%c0_23, %c0_24], %30 {strides = array<i32>} : memref<16x128xf32, #tpu.memory_space<vmem>>, vector<16x128xf32>,
    return
  }
  func.func @transform_0(%arg0: i32) -> (i32, i32) {
    %c0_i32 = arith.constant 0 : i32
    %c0_i32_0 = arith.constant 0 : i32
    return %arg0, %c0_i32 : i32, i32
  }
  func.func @transform_1(%arg0: i32) -> (i32, i32) {
    %c0_i32 = arith.constant 0 : i32
    %c0_i32_0 = arith.constant 0 : i32
    %c0_i32_1 = arith.constant 0 : i32
    return %c0_i32, %c0_i32_0 : i32, i32
  }
  func.func @transform_2(%arg0: i32) -> (i32, i32) {
    %c0_i32 = arith.constant 0 : i32
    %c0_i32_0 = arith.constant 0 : i32
    %c0_i32_1 = arith.constant 0 : i32
    return %c0_i32, %c0_i32_0 : i32, i32
  }
  func.func @transform_3(%arg0: i32) -> (i32, i32) {
    %c0_i32 = arith.constant 0 : i32
    %c0_i32_0 = arith.constant 0 : i32
    %c0_i32_1 = arith.constant 0 : i32
    return %c0_i32, %c0_i32_0 : i32, i32
  }
  func.func @transform_4(%arg0: i32) -> (i32, i32) {
    %c0_i32 = arith.constant 0 : i32
    %c0_i32_0 = arith.constant 0 : i32
    %c0_i32_1 = arith.constant 0 : i32
    return %c0_i32, %c0_i32_0 : i32, i32
  }
  func.func @transform_5(%arg0: i32) -> (i32, i32) {
    %c0_i32 = arith.constant 0 : i32
    %c0_i32_0 = arith.constant 0 : i32
    %c0_i32_1 = arith.constant 0 : i32
    return %c0_i32, %c0_i32_0 : i32, i32
  }
  func.func @transform_6(%arg0: i32) -> (i32, i32) {
    %c0_i32 = arith.constant 0 : i32
    %c0_i32_0 = arith.constant 0 : i32
    %c0_i32_1 = arith.constant 0 : i32
    return %c0_i32, %c0_i32_0 : i32, i32
  }
  func.func @transform_7(%arg0: i32) -> (i32, i32) {
    %c0_i32 = arith.constant 0 : i32
    %c0_i32_0 = arith.constant 0 : i32
    %c0_i32_1 = arith.constant 0 : i32
    return %c0_i32, %c0_i32_0 : i32, i32
  }
  func.func @transform_8(%arg0: i32) -> (i32, i32) {
    %c0_i32 = arith.constant 0 : i32
    %c0_i32_0 = arith.constant 0 : i32
    %c0_i32_1 = arith.constant 0 : i32
    return %c0_i32, %c0_i32_0 : i32, i32
  }
  func.func @transform_9(%arg0: i32) -> (i32, i32) {
    %c0_i32 = arith.constant 0 : i32
    %c0_i32_0 = arith.constant 0 : i32
    return %arg0, %c0_i32 : i32, i32
  }
}

</mosaic_0001>

<llo_original>
// kernel: tpu_custom_call.1
$region0: #{tpu_custom_call.1}
  #allocation0 [shape = 'u32[]', space=smem, size = 0x4, offset = 0x4, fixed_abs, tag = 'smem constant byte address 0x4 - core index']
  #allocation1 [shape = 'u32[144,128]{1,0:T(1,128)}', space=vmem, size = 0x12000, scoped, tag = 'internal scratch']
  %s0 = inlined_call_operand.hbm [shape: bf16[16,64], index: 0, kind: input, shape index: {}]
  %s1 = inlined_call_operand.hbm [shape: bf16[64,256], index: 1, kind: input, shape index: {}]
  %s2 = inlined_call_operand.vmem [shape: f32[1,256], index: 2, kind: input, shape index: {}]
  %s3 = inlined_call_operand.hbm [shape: bf16[256,512], index: 3, kind: input, shape index: {}]
  %s4 = inlined_call_operand.vmem [shape: f32[1,512], index: 4, kind: input, shape index: {}]
  %s5 = inlined_call_operand.hbm [shape: bf16[512,1024], index: 5, kind: input, shape index: {}]
  %s6 = inlined_call_operand.vmem [shape: f32[1,1024], index: 6, kind: input, shape index: {}]
  %s7 = inlined_call_operand.hbm [shape: bf16[1024,128], index: 7, kind: input, shape index: {}]
  %s8 = inlined_call_operand.vmem [shape: f32[1,128], index: 8, kind: input, shape index: {}]
  %s9 = inlined_call_operand.hbm [shape: f32[16,128], index: 9, kind: output, shape index: {}]
  %s10 = sld [smem:[#allocation0]]
  $region66: #{tpu_custom_call.1} parent=0
    _
  %s12 = ssub.s32 1, %s10
  %s13 = scalar_select 0, %s12, %s10
  $region1: #{tpu_custom_call.1} parent=0
    #allocation2 [shape = 'u8[4096]{0}', space=vmem, size = 0x1000, scoped, tag = 'input window, operand 0, single buffered']
    #allocation3 [shape = 's32[1]{0}', space=sflag, size = 0x4, scoped, tag = 'scoped memory for tpu_custom_call.1']
    #allocation4 [shape = 's32[1]{0}', space=sflag, size = 0x4, scoped, tag = 'scoped memory for tpu_custom_call.1']
    #allocation5 [shape = 'u8[32768]{0}', space=vmem, size = 0x8000, scoped, tag = 'input window, operand 1, single buffered']
    #allocation6 [shape = 's32[1]{0}', space=sflag, size = 0x4, scoped, tag = 'scoped memory for tpu_custom_call.1']
    #allocation7 [shape = 'u8[262144]{0}', space=vmem, size = 0x40000, scoped, tag = 'input window, operand 3, single buffered']
    #allocation8 [shape = 'u8[1048576]{0}', space=vmem, size = 0x100000, scoped, tag = 'input window, operand 5, single buffered']
    #allocation9 [shape = 's32[1]{0}', space=sflag, size = 0x4, scoped, tag = 'scoped memory for tpu_custom_call.1']
    #allocation10 [shape = 'u8[262144]{0}', space=vmem, size = 0x40000, scoped, tag = 'input window, operand 7, single buffered']
    #allocation11 [shape = 'u8[8192]{0}', space=vmem, size = 0x2000, scoped, tag = 'output window, operand 0, single buffered']
    %14 = vsyncpa [#allocation3], 0
    %15 = vsyncpa [#allocation6], 0
    %16 = vsyncpa [#allocation9], 0
    %17 = vsyncpa [#allocation4], 0
    // Predicated region
    $region2: #{tpu_custom_call.1} parent=1 // pred_check
      _
    $region3: #{tpu_custom_call.1} parent=1 // pred_check_branch
      %19 = sbr.rel (0) target = $region5
    $region4: #{tpu_custom_call.1} parent=1 // pred_region
      %s21 = ssub.s32 128, 128
      %22 = vsyncadd [#allocation3], %s21
      %s23 = sshll.u32 [#allocation2], 4
      %s24 = int_to_ptr.vmem [resolvable:$true] %s23
      %29 = dma.hbm_to_vmem [thread:$0]  %s0, 128, %s24, [#allocation3], 64, 64, 4
    $region5: #{tpu_custom_call.1} parent=1 // pred_fallthru
      _
    // Predicated region
    $region6: #{tpu_custom_call.1} parent=1 // pred_check
      _
    $region7: #{tpu_custom_call.1} parent=1 // pred_check_branch
      %31 = sbr.rel (0) target = $region9
    $region8: #{tpu_custom_call.1} parent=1 // pred_region
      %s33 = ssub.s32 1024, 1024
      %34 = vsyncadd [#allocation6], %s33
      %s35 = sshll.u32 [#allocation5], 4
      %s36 = int_to_ptr.vmem [resolvable:$true] %s35
      %41 = dma.hbm_to_vmem [thread:$0]  %s1, 1024, %s36, [#allocation6], 128, 128, 8
    $region9: #{tpu_custom_call.1} parent=1 // pred_fallthru
      _
    // Predicated region
    $region10: #{tpu_custom_call.1} parent=1 // pred_check
      _
    $region11: #{tpu_custom_call.1} parent=1 // pred_check_branch
      %43 = sbr.rel (0) target = $region13
    $region12: #{tpu_custom_call.1} parent=1 // pred_region
      _
    $region13: #{tpu_custom_call.1} parent=1 // pred_fallthru
      _
    // Predicated region
    $region14: #{tpu_custom_call.1} parent=1 // pred_check
      _
    $region15: #{tpu_custom_call.1} parent=1 // pred_check_branch
      %45 = sbr.rel (0) target = $region17
    $region16: #{tpu_custom_call.1} parent=1 // pred_region
      %s47 = ssub.s32 8192, 8192
      %48 = vsyncadd [#allocation6], %s47
      %s49 = sshll.u32 [#allocation7], 4
      %s50 = int_to_ptr.vmem [resolvable:$true] %s49
      %55 = dma.hbm_to_vmem [thread:$0]  %s3, 8192, %s50, [#allocation6], 256, 256, 16
    $region17: #{tpu_custom_call.1} parent=1 // pred_fallthru
      _
    // Predicated region
    $region18: #{tpu_custom_call.1} parent=1 // pred_check
      _
    $region19: #{tpu_custom_call.1} parent=1 // pred_check_branch
      %57 = sbr.rel (0) target = $region21
    $region20: #{tpu_custom_call.1} parent=1 // pred_region
      _
    $region21: #{tpu_custom_call.1} parent=1 // pred_fallthru
      _
    // Predicated region
    $region22: #{tpu_custom_call.1} parent=1 // pred_check
      _
    $region23: #{tpu_custom_call.1} parent=1 // pred_check_branch
      %59 = sbr.rel (0) target = $region25
    $region24: #{tpu_custom_call.1} parent=1 // pred_region
      %s61 = ssub.s32 32768, 32768
      %62 = vsyncadd [#allocation9], %s61
      %s63 = sshll.u32 [#allocation8], 4
      %s64 = int_to_ptr.vmem [resolvable:$true] %s63
      %69 = dma.hbm_to_vmem [thread:$0]  %s5, 32768, %s64, [#allocation9], 512, 512, 32
    $region25: #{tpu_custom_call.1} parent=1 // pred_fallthru
      _
    // Predicated region
    $region26: #{tpu_custom_call.1} parent=1 // pred_check
      _
    $region27: #{tpu_custom_call.1} parent=1 // pred_check_branch
      %71 = sbr.rel (0) target = $region29
    $region28: #{tpu_custom_call.1} parent=1 // pred_region
      _
    $region29: #{tpu_custom_call.1} parent=1 // pred_fallthru
      _
    // Predicated region
    $region30: #{tpu_custom_call.1} parent=1 // pred_check
      _
    $region31: #{tpu_custom_call.1} parent=1 // pred_check_branch
      %73 = sbr.rel (0) target = $region33
    $region32: #{tpu_custom_call.1} parent=1 // pred_region
      %s75 = ssub.s32 8192, 8192
      %76 = vsyncadd [#allocation9], %s75
      %s77 = sshll.u32 [#allocation10], 4
      %s78 = int_to_ptr.vmem [resolvable:$true] %s77
      %83 = dma.hbm_to_vmem [thread:$0]  %s7, 8192, %s78, [#allocation9], 64, 64, 4
    $region33: #{tpu_custom_call.1} parent=1 // pred_fallthru
      _
    // Predicated region
    $region34: #{tpu_custom_call.1} parent=1 // pred_check
      _
    $region35: #{tpu_custom_call.1} parent=1 // pred_check_branch
      %85 = sbr.rel (0) target = $region37
    $region36: #{tpu_custom_call.1} parent=1 // pred_region
      _
    $region37: #{tpu_custom_call.1} parent=1 // pred_fallthru
      _
    // Predicated region
    $region38: #{tpu_custom_call.1} parent=1 // pred_check
      _
    $region39: #{tpu_custom_call.1} parent=1 // pred_check_branch
      %87 = sbr.rel (0) target = $region41
    $region40: #{tpu_custom_call.1} parent=1 // pred_region
      %88 = dma.done [#allocation3], 128
    $region41: #{tpu_custom_call.1} parent=1 // pred_fallthru
      _
    // Predicated region
    $region42: #{tpu_custom_call.1} parent=1 // pred_check
      _
    $region43: #{tpu_custom_call.1} parent=1 // pred_check_branch
      %90 = sbr.rel (0) target = $region45
    $region44: #{tpu_custom_call.1} parent=1 // pred_region
      %91 = dma.done [#allocation6], 1024
    $region45: #{tpu_custom_call.1} parent=1 // pred_fallthru
      _
    // Predicated region
    $region46: #{tpu_custom_call.1} parent=1 // pred_check
      _
    $region47: #{tpu_custom_call.1} parent=1 // pred_check_branch
      %93 = sbr.rel (0) target = $region49
    $region48: #{tpu_custom_call.1} parent=1 // pred_region
      %94 = dma.done [#allocation6], 8192
    $region49: #{tpu_custom_call.1} parent=1 // pred_fallthru
      _
    // Predicated region
    $region50: #{tpu_custom_call.1} parent=1 // pred_check
      _
    $region51: #{tpu_custom_call.1} parent=1 // pred_check_branch
      %96 = sbr.rel (0) target = $region53
    $region52: #{tpu_custom_call.1} parent=1 // pred_region
      %97 = dma.done [#allocation9], 32768
    $region53: #{tpu_custom_call.1} parent=1 // pred_fallthru
      _
    // Predicated region
    $region54: #{tpu_custom_call.1} parent=1 // pred_check
      _
    $region55: #{tpu_custom_call.1} parent=1 // pred_check_branch
      %99 = sbr.rel (0) target = $region57
    $region56: #{tpu_custom_call.1} parent=1 // pred_region
      %100 = dma.done [#allocation9], 8192
    $region57: #{tpu_custom_call.1} parent=1 // pred_fallthru
      _
    %v102 = vld [vmem:[#allocation2] sm:$0xf]
    %v103 = vld [vmem:[#allocation2 + $0x4] sm:$0xf]
    %v104 = vld [vmem:[#allocation5] sm:$0xff]
    %v105 = vld [vmem:[#allocation5 + $0x8] sm:$0xff]
    %v106 = vld [vmem:[#allocation5 + $0x10] sm:$0xff]
    %v107 = vld [vmem:[#allocation5 + $0x18] sm:$0xff]
    %v108 = vld [vmem:[#allocation5 + $0x20] sm:$0xff]
    %v109 = vld [vmem:[#allocation5 + $0x28] sm:$0xff]
    %v110 = vld [vmem:[#allocation5 + $0x30] sm:$0xff]
    %v111 = vld [vmem:[#allocation5 + $0x38] sm:$0xff]
    %v112 = vld [vmem:[%s2] sm:$0x3]
    %v114 = vlaneseq
    %v115 = vshrl.u32 %v114, 7
    %v116 = vsub.s32 0, %v115
    %v117 = vrot.slane %v112, %v116
    %v118 = vlaneseq
    %v119 = vshrl.u32 %v118, 7
    %v120 = vsub.s32 1, %v119
    %v121 = vrot.slane %v112, %v120
    %v126 = vunpack.c.l.b16 %v102
    %v127 = vunpack.c.l.b16 %v103
    %v128 = vpack.c.b16 %v127, %v126
    %v137 = vunpack.c.l.b16 %v104
    %v138 = vunpack.c.h.b16 %v104
    %v139 = vunpack.c.l.b16 %v105
    %v140 = vunpack.c.h.b16 %v105
    %v141 = vunpack.c.l.b16 %v106
    %v142 = vunpack.c.h.b16 %v106
    %v143 = vunpack.c.l.b16 %v107
    %v144 = vunpack.c.h.b16 %v107
    %v145 = vunpack.c.l.b16 %v108
    %v146 = vunpack.c.h.b16 %v108
    %v147 = vunpack.c.l.b16 %v109
    %v148 = vunpack.c.h.b16 %v109
    %v149 = vunpack.c.l.b16 %v110
    %v150 = vunpack.c.h.b16 %v110
    %v151 = vunpack.c.l.b16 %v111
    %v152 = vunpack.c.h.b16 %v111
    %v153 = vpack.c.b16 %v139, %v137
    %v154 = vpack.c.b16 %v140, %v138
    %v155 = vpack.c.b16 %v143, %v141
    %v156 = vpack.c.b16 %v144, %v142
    %v157 = vpack.c.b16 %v147, %v145
    %v158 = vpack.c.b16 %v148, %v146
    %v159 = vpack.c.b16 %v151, %v149
    %v160 = vpack.c.b16 %v152, %v150
    %vm169 = vcmask 523264
    %v171 = vsel %vm169, %v128, 0
    %173 = vmatprep.subr.bf16.mxu0 %v154
    %174 = vmatpush1.bf16.msra.mxu0 %v153
    %175 = vmatprep.subr.bf16.mxu0 %v156
    %176 = vmatpush1.bf16.msra.mxu0 %v155
    %177 = vmatprep.subr.bf16.mxu0 %v158
    %178 = vmatpush1.bf16.msra.mxu0 %v157
    %179 = vmatprep.subr.bf16.mxu0 %v160
    %180 = vmatpush1.bf16.msra.mxu0 %v159
    %181 = vmatprep.subr.bf16.mxu0 0
    %182 = vmatpush1.bf16.msra.mxu0 0
    %183 = vmatprep.subr.bf16.mxu0 0
    %184 = vmatpush1.bf16.msra.mxu0 0
    %185 = vmatprep.subr.bf16.mxu0 0
    %186 = vmatpush1.bf16.msra.mxu0 0
    %187 = vmatprep.subr.bf16.mxu0 0
    %188 = vmatpush1.bf16.msra.mxu0 0
    %189 = vmatprep.subr.bf16.mxu0 0
    %190 = vmatpush1.bf16.msra.mxu0 0
    %191 = vmatprep.subr.bf16.mxu0 0
    %192 = vmatpush1.bf16.msra.mxu0 0
    %193 = vmatprep.subr.bf16.mxu0 0
    %194 = vmatpush1.bf16.msra.mxu0 0
    %195 = vmatprep.subr.bf16.mxu0 0
    %196 = vmatpush1.bf16.msra.mxu0 0
    %197 = vmatprep.subr.bf16.mxu0 0
    %198 = vmatpush1.bf16.msra.mxu0 0
    %199 = vmatprep.subr.bf16.mxu0 0
    %200 = vmatpush1.bf16.msra.mxu0 0
    %201 = vmatprep.subr.bf16.mxu0 0
    %202 = vmatpush1.bf16.msra.mxu0 0
    %203 = vmatprep.subr.bf16.mxu0 0
    %204 = vmatpush1.bf16.msra.mxu0 0
    %205 = vmatprep.mubr.bf16.mxu0 0
    %206 = vmatmul.mubr.bf16.gmra.mrb[0].mxu0 %v171
    %v207 = vpop.f32.mrb[0].mxu0
    %v208 = vadd.f32 %v117, %v207
    %v209 = vpop.f32.mrb[0].mxu0
    %v210 = vadd.f32 %v121, %v209
    %v211 = vpop.f32.mrb[0].mxu0
    %v212 = vadd.f32 %v117, %v211
    %v213 = vpop.f32.mrb[0].mxu0
    %v214 = vadd.f32 %v121, %v213
    %215 = vdwg.mxu0
    %v216 = vpack.c.bf16 %v212, %v208
    %v217 = vpack.c.bf16 %v214, %v210
    %v218 = vmax.bf16 %v216, 0
    %v219 = vmax.bf16 %v217, 0
    %v220 = vld [vmem:[#allocation7] sm:$0xff]
    %v221 = vld [vmem:[#allocation7 + $0x8] sm:$0xff]
    %v222 = vld [vmem:[#allocation7 + $0x10] sm:$0xff]
    %v223 = vld [vmem:[#allocation7 + $0x18] sm:$0xff]
    %v224 = vld [vmem:[#allocation7 + $0x20] sm:$0xff]
    %v225 = vld [vmem:[#allocation7 + $0x28] sm:$0xff]
    %v226 = vld [vmem:[#allocation7 + $0x30] sm:$0xff]
    %v227 = vld [vmem:[#allocation7 + $0x38] sm:$0xff]
    %v228 = vld [vmem:[#allocation7 + $0x40] sm:$0xff]
    %v229 = vld [vmem:[#allocation7 + $0x48] sm:$0xff]
    %v230 = vld [vmem:[#allocation7 + $0x50] sm:$0xff]
    %v231 = vld [vmem:[#allocation7 + $0x58] sm:$0xff]
    %v232 = vld [vmem:[#allocation7 + $0x60] sm:$0xff]
    %v233 = vld [vmem:[#allocation7 + $0x68] sm:$0xff]
    %v234 = vld [vmem:[#allocation7 + $0x70] sm:$0xff]
    %v235 = vld [vmem:[#allocation7 + $0x78] sm:$0xff]
    %v236 = vld [vmem:[#allocation7 + $0x80] sm:$0xff]
    %v237 = vld [vmem:[#allocation7 + $0x88] sm:$0xff]
    %v238 = vld [vmem:[#allocation7 + $0x90] sm:$0xff]
    %v239 = vld [vmem:[#allocation7 + $0x98] sm:$0xff]
    %v240 = vld [vmem:[#allocation7 + $0xa0] sm:$0xff]
    %v241 = vld [vmem:[#allocation7 + $0xa8] sm:$0xff]
    %v242 = vld [vmem:[#allocation7 + $0xb0] sm:$0xff]
    %v243 = vld [vmem:[#allocation7 + $0xb8] sm:$0xff]
    %v244 = vld [vmem:[#allocation7 + $0xc0] sm:$0xff]
    %v245 = vld [vmem:[#allocation7 + $0xc8] sm:$0xff]
    %v246 = vld [vmem:[#allocation7 + $0xd0] sm:$0xff]
    %v247 = vld [vmem:[#allocation7 + $0xd8] sm:$0xff]
    %v248 = vld [vmem:[#allocation7 + $0xe0] sm:$0xff]
    %v249 = vld [vmem:[#allocation7 + $0xe8] sm:$0xff]
    %v250 = vld [vmem:[#allocation7 + $0xf0] sm:$0xff]
    %v251 = vld [vmem:[#allocation7 + $0xf8] sm:$0xff]
    %v252 = vld [vmem:[#allocation7 + $0x100] sm:$0xff]
    %v253 = vld [vmem:[#allocation7 + $0x108] sm:$0xff]
    %v254 = vld [vmem:[#allocation7 + $0x110] sm:$0xff]
    %v255 = vld [vmem:[#allocation7 + $0x118] sm:$0xff]
    %v256 = vld [vmem:[#allocation7 + $0x120] sm:$0xff]
    %v257 = vld [vmem:[#allocation7 + $0x128] sm:$0xff]
    %v258 = vld [vmem:[#allocation7 + $0x130] sm:$0xff]
    %v259 = vld [vmem:[#allocation7 + $0x138] sm:$0xff]
    %v260 = vld [vmem:[#allocation7 + $0x140] sm:$0xff]
    %v261 = vld [vmem:[#allocation7 + $0x148] sm:$0xff]
    %v262 = vld [vmem:[#allocation7 + $0x150] sm:$0xff]
    %v263 = vld [vmem:[#allocation7 + $0x158] sm:$0xff]
    %v264 = vld [vmem:[#allocation7 + $0x160] sm:$0xff]
    %v265 = vld [vmem:[#allocation7 + $0x168] sm:$0xff]
    %v266 = vld [vmem:[#allocation7 + $0x170] sm:$0xff]
    %v267 = vld [vmem:[#allocation7 + $0x178] sm:$0xff]
    %v268 = vld [vmem:[#allocation7 + $0x180] sm:$0xff]
    %v269 = vld [vmem:[#allocation7 + $0x188] sm:$0xff]
    %v270 = vld [vmem:[#allocation7 + $0x190] sm:$0xff]
    %v271 = vld [vmem:[#allocation7 + $0x198] sm:$0xff]
    %v272 = vld [vmem:[#allocation7 + $0x1a0] sm:$0xff]
    %v273 = vld [vmem:[#allocation7 + $0x1a8] sm:$0xff]
    %v274 = vld [vmem:[#allocation7 + $0x1b0] sm:$0xff]
    %v275 = vld [vmem:[#allocation7 + $0x1b8] sm:$0xff]
    %v276 = vld [vmem:[#allocation7 + $0x1c0] sm:$0xff]
    %v277 = vld [vmem:[#allocation7 + $0x1c8] sm:$0xff]
    %v278 = vld [vmem:[#allocation7 + $0x1d0] sm:$0xff]
    %v279 = vld [vmem:[#allocation7 + $0x1d8] sm:$0xff]
    %v280 = vld [vmem:[#allocation7 + $0x1e0] sm:$0xff]
    %v281 = vld [vmem:[#allocation7 + $0x1e8] sm:$0xff]
    %v282 = vld [vmem:[#allocation7 + $0x1f0] sm:$0xff]
    %v283 = vld [vmem:[#allocation7 + $0x1f8] sm:$0xff]
    %v284 = vld [vmem:[%s4] sm:$0xf]
    %v286 = vlaneseq
    %v287 = vshrl.u32 %v286, 7
    %v288 = vsub.s32 0, %v287
    %v289 = vrot.slane %v284, %v288
    %v290 = vlaneseq
    %v291 = vshrl.u32 %v290, 7
    %v292 = vsub.s32 1, %v291
    %v293 = vrot.slane %v284, %v292
    %v294 = vlaneseq
    %v295 = vshrl.u32 %v294, 7
    %v296 = vsub.s32 2, %v295
    %v297 = vrot.slane %v284, %v296
    %v298 = vlaneseq
    %v299 = vshrl.u32 %v298, 7
    %v300 = vsub.s32 3, %v299
    %v301 = vrot.slane %v284, %v300
    %v370 = vunpack.c.l.b16 %v220
    %v371 = vunpack.c.h.b16 %v220
    %v372 = vunpack.c.l.b16 %v221
    %v373 = vunpack.c.h.b16 %v221
    %v374 = vunpack.c.l.b16 %v222
    %v375 = vunpack.c.h.b16 %v222
    %v376 = vunpack.c.l.b16 %v223
    %v377 = vunpack.c.h.b16 %v223
    %v378 = vunpack.c.l.b16 %v224
    %v379 = vunpack.c.h.b16 %v224
    %v380 = vunpack.c.l.b16 %v225
    %v381 = vunpack.c.h.b16 %v225
    %v382 = vunpack.c.l.b16 %v226
    %v383 = vunpack.c.h.b16 %v226
    %v384 = vunpack.c.l.b16 %v227
    %v385 = vunpack.c.h.b16 %v227
    %v386 = vunpack.c.l.b16 %v228
    %v387 = vunpack.c.h.b16 %v228
    %v388 = vunpack.c.l.b16 %v229
    %v389 = vunpack.c.h.b16 %v229
    %v390 = vunpack.c.l.b16 %v230
    %v391 = vunpack.c.h.b16 %v230
    %v392 = vunpack.c.l.b16 %v231
    %v393 = vunpack.c.h.b16 %v231
    %v394 = vunpack.c.l.b16 %v232
    %v395 = vunpack.c.h.b16 %v232
    %v396 = vunpack.c.l.b16 %v233
    %v397 = vunpack.c.h.b16 %v233
    %v398 = vunpack.c.l.b16 %v234
    %v399 = vunpack.c.h.b16 %v234
    %v400 = vunpack.c.l.b16 %v235
    %v401 = vunpack.c.h.b16 %v235
    %v402 = vunpack.c.l.b16 %v236
    %v403 = vunpack.c.h.b16 %v236
    %v404 = vunpack.c.l.b16 %v237
    %v405 = vunpack.c.h.b16 %v237
    %v406 = vunpack.c.l.b16 %v238
    %v407 = vunpack.c.h.b16 %v238
    %v408 = vunpack.c.l.b16 %v239
    %v409 = vunpack.c.h.b16 %v239
    %v410 = vunpack.c.l.b16 %v240
    %v411 = vunpack.c.h.b16 %v240
    %v412 = vunpack.c.l.b16 %v241
    %v413 = vunpack.c.h.b16 %v241
    %v414 = vunpack.c.l.b16 %v242
    %v415 = vunpack.c.h.b16 %v242
    %v416 = vunpack.c.l.b16 %v243
    %v417 = vunpack.c.h.b16 %v243
    %v418 = vunpack.c.l.b16 %v244
    %v419 = vunpack.c.h.b16 %v244
    %v420 = vunpack.c.l.b16 %v245
    %v421 = vunpack.c.h.b16 %v245
    %v422 = vunpack.c.l.b16 %v246
    %v423 = vunpack.c.h.b16 %v246
    %v424 = vunpack.c.l.b16 %v247
    %v425 = vunpack.c.h.b16 %v247
    %v426 = vunpack.c.l.b16 %v248
    %v427 = vunpack.c.h.b16 %v248
    %v428 = vunpack.c.l.b16 %v249
    %v429 = vunpack.c.h.b16 %v249
    %v430 = vunpack.c.l.b16 %v250
    %v431 = vunpack.c.h.b16 %v250
    %v432 = vunpack.c.l.b16 %v251
    %v433 = vunpack.c.h.b16 %v251
    %v434 = vunpack.c.l.b16 %v252
    %v435 = vunpack.c.h.b16 %v252
    %v436 = vunpack.c.l.b16 %v253
    %v437 = vunpack.c.h.b16 %v253
    %v438 = vunpack.c.l.b16 %v254
    %v439 = vunpack.c.h.b16 %v254
    %v440 = vunpack.c.l.b16 %v255
    %v441 = vunpack.c.h.b16 %v255
    %v442 = vunpack.c.l.b16 %v256
    %v443 = vunpack.c.h.b16 %v256
    %v444 = vunpack.c.l.b16 %v257
    %v445 = vunpack.c.h.b16 %v257
    %v446 = vunpack.c.l.b16 %v258
    %v447 = vunpack.c.h.b16 %v258
    %v448 = vunpack.c.l.b16 %v259
    %v449 = vunpack.c.h.b16 %v259
    %v450 = vunpack.c.l.b16 %v260
    %v451 = vunpack.c.h.b16 %v260
    %v452 = vunpack.c.l.b16 %v261
    %v453 = vunpack.c.h.b16 %v261
    %v454 = vunpack.c.l.b16 %v262
    %v455 = vunpack.c.h.b16 %v262
    %v456 = vunpack.c.l.b16 %v263
    %v457 = vunpack.c.h.b16 %v263
    %v458 = vunpack.c.l.b16 %v264
    %v459 = vunpack.c.h.b16 %v264
    %v460 = vunpack.c.l.b16 %v265
    %v461 = vunpack.c.h.b16 %v265
    %v462 = vunpack.c.l.b16 %v266
    %v463 = vunpack.c.h.b16 %v266
    %v464 = vunpack.c.l.b16 %v267
    %v465 = vunpack.c.h.b16 %v267
    %v466 = vunpack.c.l.b16 %v268
    %v467 = vunpack.c.h.b16 %v268
    %v468 = vunpack.c.l.b16 %v269
    %v469 = vunpack.c.h.b16 %v269
    %v470 = vunpack.c.l.b16 %v270
    %v471 = vunpack.c.h.b16 %v270
    %v472 = vunpack.c.l.b16 %v271
    %v473 = vunpack.c.h.b16 %v271
    %v474 = vunpack.c.l.b16 %v272
    %v475 = vunpack.c.h.b16 %v272
    %v476 = vunpack.c.l.b16 %v273
    %v477 = vunpack.c.h.b16 %v273
    %v478 = vunpack.c.l.b16 %v274
    %v479 = vunpack.c.h.b16 %v274
    %v480 = vunpack.c.l.b16 %v275
    %v481 = vunpack.c.h.b16 %v275
    %v482 = vunpack.c.l.b16 %v276
    %v483 = vunpack.c.h.b16 %v276
    %v484 = vunpack.c.l.b16 %v277
    %v485 = vunpack.c.h.b16 %v277
    %v486 = vunpack.c.l.b16 %v278
    %v487 = vunpack.c.h.b16 %v278
    %v488 = vunpack.c.l.b16 %v279
    %v489 = vunpack.c.h.b16 %v279
    %v490 = vunpack.c.l.b16 %v280
    %v491 = vunpack.c.h.b16 %v280
    %v492 = vunpack.c.l.b16 %v281
    %v493 = vunpack.c.h.b16 %v281
    %v494 = vunpack.c.l.b16 %v282
    %v495 = vunpack.c.h.b16 %v282
    %v496 = vunpack.c.l.b16 %v283
    %v497 = vunpack.c.h.b16 %v283
    %v498 = vpack.c.b16 %v374, %v370
    %v499 = vpack.c.b16 %v375, %v371
    %v500 = vpack.c.b16 %v376, %v372
    %v501 = vpack.c.b16 %v377, %v373
    %v502 = vpack.c.b16 %v382, %v378
    %v503 = vpack.c.b16 %v383, %v379
    %v504 = vpack.c.b16 %v384, %v380
    %v505 = vpack.c.b16 %v385, %v381
    %v506 = vpack.c.b16 %v390, %v386
    %v507 = vpack.c.b16 %v391, %v387
    %v508 = vpack.c.b16 %v392, %v388
    %v509 = vpack.c.b16 %v393, %v389
    %v510 = vpack.c.b16 %v398, %v394
    %v511 = vpack.c.b16 %v399, %v395
    %v512 = vpack.c.b16 %v400, %v396
    %v513 = vpack.c.b16 %v401, %v397
    %v514 = vpack.c.b16 %v406, %v402
    %v515 = vpack.c.b16 %v407, %v403
    %v516 = vpack.c.b16 %v408, %v404
    %v517 = vpack.c.b16 %v409, %v405
    %v518 = vpack.c.b16 %v414, %v410
    %v519 = vpack.c.b16 %v415, %v411
    %v520 = vpack.c.b16 %v416, %v412
    %v521 = vpack.c.b16 %v417, %v413
    %v522 = vpack.c.b16 %v422, %v418
    %v523 = vpack.c.b16 %v423, %v419
    %v524 = vpack.c.b16 %v424, %v420
    %v525 = vpack.c.b16 %v425, %v421
    %v526 = vpack.c.b16 %v430, %v426
    %v527 = vpack.c.b16 %v431, %v427
    %v528 = vpack.c.b16 %v432, %v428
    %v529 = vpack.c.b16 %v433, %v429
    %v530 = vpack.c.b16 %v438, %v434
    %v531 = vpack.c.b16 %v439, %v435
    %v532 = vpack.c.b16 %v440, %v436
    %v533 = vpack.c.b16 %v441, %v437
    %v534 = vpack.c.b16 %v446, %v442
    %v535 = vpack.c.b16 %v447, %v443
    %v536 = vpack.c.b16 %v448, %v444
    %v537 = vpack.c.b16 %v449, %v445
    %v538 = vpack.c.b16 %v454, %v450
    %v539 = vpack.c.b16 %v455, %v451
    %v540 = vpack.c.b16 %v456, %v452
    %v541 = vpack.c.b16 %v457, %v453
    %v542 = vpack.c.b16 %v462, %v458
    %v543 = vpack.c.b16 %v463, %v459
    %v544 = vpack.c.b16 %v464, %v460
    %v545 = vpack.c.b16 %v465, %v461
    %v546 = vpack.c.b16 %v470, %v466
    %v547 = vpack.c.b16 %v471, %v467
    %v548 = vpack.c.b16 %v472, %v468
    %v549 = vpack.c.b16 %v473, %v469
    %v550 = vpack.c.b16 %v478, %v474
    %v551 = vpack.c.b16 %v479, %v475
    %v552 = vpack.c.b16 %v480, %v476
    %v553 = vpack.c.b16 %v481, %v477
    %v554 = vpack.c.b16 %v486, %v482
    %v555 = vpack.c.b16 %v487, %v483
    %v556 = vpack.c.b16 %v488, %v484
    %v557 = vpack.c.b16 %v489, %v485
    %v558 = vpack.c.b16 %v494, %v490
    %v559 = vpack.c.b16 %v495, %v491
    %v560 = vpack.c.b16 %v496, %v492
    %v561 = vpack.c.b16 %v497, %v493
    %626 = vmatprep.subr.bf16.mxu0 %v499
    %627 = vmatpush1.bf16.msra.mxu0 %v498
    %628 = vmatprep.subr.bf16.mxu0 %v503
    %629 = vmatpush1.bf16.msra.mxu0 %v502
    %630 = vmatprep.subr.bf16.mxu0 %v507
    %631 = vmatpush1.bf16.msra.mxu0 %v506
    %632 = vmatprep.subr.bf16.mxu0 %v511
    %633 = vmatpush1.bf16.msra.mxu0 %v510
    %634 = vmatprep.subr.bf16.mxu0 %v515
    %635 = vmatpush1.bf16.msra.mxu0 %v514
    %636 = vmatprep.subr.bf16.mxu0 %v519
    %637 = vmatpush1.bf16.msra.mxu0 %v518
    %638 = vmatprep.subr.bf16.mxu0 %v523
    %639 = vmatpush1.bf16.msra.mxu0 %v522
    %640 = vmatprep.subr.bf16.mxu0 %v527
    %641 = vmatpush1.bf16.msra.mxu0 %v526
    %642 = vmatprep.subr.bf16.mxu0 %v531
    %643 = vmatpush1.bf16.msra.mxu0 %v530
    %644 = vmatprep.subr.bf16.mxu0 %v535
    %645 = vmatpush1.bf16.msra.mxu0 %v534
    %646 = vmatprep.subr.bf16.mxu0 %v539
    %647 = vmatpush1.bf16.msra.mxu0 %v538
    %648 = vmatprep.subr.bf16.mxu0 %v543
    %649 = vmatpush1.bf16.msra.mxu0 %v542
    %650 = vmatprep.subr.bf16.mxu0 %v547
    %651 = vmatpush1.bf16.msra.mxu0 %v546
    %652 = vmatprep.subr.bf16.mxu0 %v551
    %653 = vmatpush1.bf16.msra.mxu0 %v550
    %654 = vmatprep.subr.bf16.mxu0 %v555
    %655 = vmatpush1.bf16.msra.mxu0 %v554
    %656 = vmatprep.subr.bf16.mxu0 %v559
    %657 = vmatpush1.bf16.msra.mxu0 %v558
    %658 = vmatprep.mubr.bf16.mxu0 %v219
    %659 = vmatmul.mubr.bf16.gmra.mrb[0].mxu0 %v218
    %v660 = vpop.f32.mrb[0].mxu0
    %v661 = vadd.f32 %v289, %v660
    %v662 = vpop.f32.mrb[0].mxu0
    %v663 = vadd.f32 %v293, %v662
    %v664 = vpop.f32.mrb[0].mxu0
    %v665 = vadd.f32 %v289, %v664
    %v666 = vpop.f32.mrb[0].mxu0
    %v667 = vadd.f32 %v293, %v666
    %668 = vdwg.mxu0
    %669 = vmatprep.subr.bf16.mxu0 %v501
    %670 = vmatpush1.bf16.msra.mxu0 %v500
    %671 = vmatprep.subr.bf16.mxu0 %v505
    %672 = vmatpush1.bf16.msra.mxu0 %v504
    %673 = vmatprep.subr.bf16.mxu0 %v509
    %674 = vmatpush1.bf16.msra.mxu0 %v508
    %675 = vmatprep.subr.bf16.mxu0 %v513
    %676 = vmatpush1.bf16.msra.mxu0 %v512
    %677 = vmatprep.subr.bf16.mxu0 %v517
    %678 = vmatpush1.bf16.msra.mxu0 %v516
    %679 = vmatprep.subr.bf16.mxu0 %v521
    %680 = vmatpush1.bf16.msra.mxu0 %v520
    %681 = vmatprep.subr.bf16.mxu0 %v525
    %682 = vmatpush1.bf16.msra.mxu0 %v524
    %683 = vmatprep.subr.bf16.mxu0 %v529
    %684 = vmatpush1.bf16.msra.mxu0 %v528
    %685 = vmatprep.subr.bf16.mxu0 %v533
    %686 = vmatpush1.bf16.msra.mxu0 %v532
    %687 = vmatprep.subr.bf16.mxu0 %v537
    %688 = vmatpush1.bf16.msra.mxu0 %v536
    %689 = vmatprep.subr.bf16.mxu0 %v541
    %690 = vmatpush1.bf16.msra.mxu0 %v540
    %691 = vmatprep.subr.bf16.mxu0 %v545
    %692 = vmatpush1.bf16.msra.mxu0 %v544
    %693 = vmatprep.subr.bf16.mxu0 %v549
    %694 = vmatpush1.bf16.msra.mxu0 %v548
    %695 = vmatprep.subr.bf16.mxu0 %v553
    %696 = vmatpush1.bf16.msra.mxu0 %v552
    %697 = vmatprep.subr.bf16.mxu0 %v557
    %698 = vmatpush1.bf16.msra.mxu0 %v556
    %699 = vmatprep.subr.bf16.mxu0 %v561
    %700 = vmatpush1.bf16.msra.mxu0 %v560
    %701 = vmatprep.mubr.bf16.mxu0 %v219
    %702 = vmatmul.mubr.bf16.gmra.mrb[0].mxu0 %v218
    %v703 = vpop.f32.mrb[0].mxu0
    %v704 = vadd.f32 %v297, %v703
    %v705 = vpop.f32.mrb[0].mxu0
    %v706 = vadd.f32 %v301, %v705
    %v707 = vpop.f32.mrb[0].mxu0
    %v708 = vadd.f32 %v297, %v707
    %v709 = vpop.f32.mrb[0].mxu0
    %v710 = vadd.f32 %v301, %v709
    %711 = vdwg.mxu0
    %v712 = vpack.c.bf16 %v665, %v661
    %v713 = vpack.c.bf16 %v667, %v663
    %v714 = vpack.c.bf16 %v708, %v704
    %v715 = vpack.c.bf16 %v710, %v706
    %v716 = vmax.bf16 %v712, 0
    %v717 = vmax.bf16 %v713, 0
    %v718 = vmax.bf16 %v714, 0
    %v719 = vmax.bf16 %v715, 0
    %v720 = vld [vmem:[#allocation8] sm:$0xff]
    %v721 = vld [vmem:[#allocation8 + $0x8] sm:$0xff]
    %v722 = vld [vmem:[#allocation8 + $0x10] sm:$0xff]
    %v723 = vld [vmem:[#allocation8 + $0x18] sm:$0xff]
    %v724 = vld [vmem:[#allocation8 + $0x20] sm:$0xff]
    %v725 = vld [vmem:[#allocation8 + $0x28] sm:$0xff]
    %v726 = vld [vmem:[#allocation8 + $0x30] sm:$0xff]
    %v727 = vld [vmem:[#allocation8 + $0x38] sm:$0xff]
    %v728 = vld [vmem:[#allocation8 + $0x40] sm:$0xff]
    %v729 = vld [vmem:[#allocation8 + $0x48] sm:$0xff]
    %v730 = vld [vmem:[#allocation8 + $0x50] sm:$0xff]
    %v731 = vld [vmem:[#allocation8 + $0x58] sm:$0xff]
    %v732 = vld [vmem:[#allocation8 + $0x60] sm:$0xff]
    %v733 = vld [vmem:[#allocation8 + $0x68] sm:$0xff]
    %v734 = vld [vmem:[#allocation8 + $0x70] sm:$0xff]
    %v735 = vld [vmem:[#allocation8 + $0x78] sm:$0xff]
    %v736 = vld [vmem:[#allocation8 + $0x80] sm:$0xff]
    %v737 = vld [vmem:[#allocation8 + $0x88] sm:$0xff]
    %v738 = vld [vmem:[#allocation8 + $0x90] sm:$0xff]
    %v739 = vld [vmem:[#allocation8 + $0x98] sm:$0xff]
    %v740 = vld [vmem:[#allocation8 + $0xa0] sm:$0xff]
    %v741 = vld [vmem:[#allocation8 + $0xa8] sm:$0xff]
    %v742 = vld [vmem:[#allocation8 + $0xb0] sm:$0xff]
    %v743 = vld [vmem:[#allocation8 + $0xb8] sm:$0xff]
    %v744 = vld [vmem:[#allocation8 + $0xc0] sm:$0xff]
    %v745 = vld [vmem:[#allocation8 + $0xc8] sm:$0xff]
    %v746 = vld [vmem:[#allocation8 + $0xd0] sm:$0xff]
    %v747 = vld [vmem:[#allocation8 + $0xd8] sm:$0xff]
    %v748 = vld [vmem:[#allocation8 + $0xe0] sm:$0xff]
    %v749 = vld [vmem:[#allocation8 + $0xe8] sm:$0xff]
    %v750 = vld [vmem:[#allocation8 + $0xf0] sm:$0xff]
    %v751 = vld [vmem:[#allocation8 + $0xf8] sm:$0xff]
    %v752 = vld [vmem:[#allocation8 + $0x100] sm:$0xff]
    %v753 = vld [vmem:[#allocation8 + $0x108] sm:$0xff]
    %v754 = vld [vmem:[#allocation8 + $0x110] sm:$0xff]
    %v755 = vld [vmem:[#allocation8 + $0x118] sm:$0xff]
    %v756 = vld [vmem:[#allocation8 + $0x120] sm:$0xff]
    %v757 = vld [vmem:[#allocation8 + $0x128] sm:$0xff]
    %v758 = vld [vmem:[#allocation8 + $0x130] sm:$0xff]
    %v759 = vld [vmem:[#allocation8 + $0x138] sm:$0xff]
    %v760 = vld [vmem:[#allocation8 + $0x140] sm:$0xff]
    %v761 = vld [vmem:[#allocation8 + $0x148] sm:$0xff]
    %v762 = vld [vmem:[#allocation8 + $0x150] sm:$0xff]
    %v763 = vld [vmem:[#allocation8 + $0x158] sm:$0xff]
    %v764 = vld [vmem:[#allocation8 + $0x160] sm:$0xff]
    %v765 = vld [vmem:[#allocation8 + $0x168] sm:$0xff]
    %v766 = vld [vmem:[#allocation8 + $0x170] sm:$0xff]
    %v767 = vld [vmem:[#allocation8 + $0x178] sm:$0xff]
    %v768 = vld [vmem:[#allocation8 + $0x180] sm:$0xff]
    %v769 = vld [vmem:[#allocation8 + $0x188] sm:$0xff]
    %v770 = vld [vmem:[#allocation8 + $0x190] sm:$0xff]
    %v771 = vld [vmem:[#allocation8 + $0x198] sm:$0xff]
    %v772 = vld [vmem:[#allocation8 + $0x1a0] sm:$0xff]
    %v773 = vld [vmem:[#allocation8 + $0x1a8] sm:$0xff]
    %v774 = vld [vmem:[#allocation8 + $0x1b0] sm:$0xff]
    %v775 = vld [vmem:[#allocation8 + $0x1b8] sm:$0xff]
    %v776 = vld [vmem:[#allocation8 + $0x1c0] sm:$0xff]
    %v777 = vld [vmem:[#allocation8 + $0x1c8] sm:$0xff]
    %v778 = vld [vmem:[#allocation8 + $0x1d0] sm:$0xff]
    %v779 = vld [vmem:[#allocation8 + $0x1d8] sm:$0xff]
    %v780 = vld [vmem:[#allocation8 + $0x1e0] sm:$0xff]
    %v781 = vld [vmem:[#allocation8 + $0x1e8] sm:$0xff]
    %v782 = vld [vmem:[#allocation8 + $0x1f0] sm:$0xff]
    %v783 = vld [vmem:[#allocation8 + $0x1f8] sm:$0xff]
    %v784 = vld [vmem:[#allocation8 + $0x200] sm:$0xff]
    %v785 = vld [vmem:[#allocation8 + $0x208] sm:$0xff]
    %v786 = vld [vmem:[#allocation8 + $0x210] sm:$0xff]
    %v787 = vld [vmem:[#allocation8 + $0x218] sm:$0xff]
    %v788 = vld [vmem:[#allocation8 + $0x220] sm:$0xff]
    %v789 = vld [vmem:[#allocation8 + $0x228] sm:$0xff]
    %v790 = vld [vmem:[#allocation8 + $0x230] sm:$0xff]
    %v791 = vld [vmem:[#allocation8 + $0x238] sm:$0xff]
    %v792 = vld [vmem:[#allocation8 + $0x240] sm:$0xff]
    %v793 = vld [vmem:[#allocation8 + $0x248] sm:$0xff]
    %v794 = vld [vmem:[#allocation8 + $0x250] sm:$0xff]
    %v795 = vld [vmem:[#allocation8 + $0x258] sm:$0xff]
    %v796 = vld [vmem:[#allocation8 + $0x260] sm:$0xff]
    %v797 = vld [vmem:[#allocation8 + $0x268] sm:$0xff]
    %v798 = vld [vmem:[#allocation8 + $0x270] sm:$0xff]
    %v799 = vld [vmem:[#allocation8 + $0x278] sm:$0xff]
    %v800 = vld [vmem:[#allocation8 + $0x280] sm:$0xff]
    %v801 = vld [vmem:[#allocation8 + $0x288] sm:$0xff]
    %v802 = vld [vmem:[#allocation8 + $0x290] sm:$0xff]
    %v803 = vld [vmem:[#allocation8 + $0x298] sm:$0xff]
    %v804 = vld [vmem:[#allocation8 + $0x2a0] sm:$0xff]
    %v805 = vld [vmem:[#allocation8 + $0x2a8] sm:$0xff]
    %v806 = vld [vmem:[#allocation8 + $0x2b0] sm:$0xff]
    %v807 = vld [vmem:[#allocation8 + $0x2b8] sm:$0xff]
    %v808 = vld [vmem:[#allocation8 + $0x2c0] sm:$0xff]
    %v809 = vld [vmem:[#allocation8 + $0x2c8] sm:$0xff]
    %v810 = vld [vmem:[#allocation8 + $0x2d0] sm:$0xff]
    %v811 = vld [vmem:[#allocation8 + $0x2d8] sm:$0xff]
    %v812 = vld [vmem:[#allocation8 + $0x2e0] sm:$0xff]
    %v813 = vld [vmem:[#allocation8 + $0x2e8] sm:$0xff]
    %v814 = vld [vmem:[#allocation8 + $0x2f0] sm:$0xff]
    %v815 = vld [vmem:[#allocation8 + $0x2f8] sm:$0xff]
    %v816 = vld [vmem:[#allocation8 + $0x300] sm:$0xff]
    %v817 = vld [vmem:[#allocation8 + $0x308] sm:$0xff]
    %v818 = vld [vmem:[#allocation8 + $0x310] sm:$0xff]
    %v819 = vld [vmem:[#allocation8 + $0x318] sm:$0xff]
    %v820 = vld [vmem:[#allocation8 + $0x320] sm:$0xff]
    %v821 = vld [vmem:[#allocation8 + $0x328] sm:$0xff]
    %v822 = vld [vmem:[#allocation8 + $0x330] sm:$0xff]
    %v823 = vld [vmem:[#allocation8 + $0x338] sm:$0xff]
    %v824 = vld [vmem:[#allocation8 + $0x340] sm:$0xff]
    %v825 = vld [vmem:[#allocation8 + $0x348] sm:$0xff]
    %v826 = vld [vmem:[#allocation8 + $0x350] sm:$0xff]
    %v827 = vld [vmem:[#allocation8 + $0x358] sm:$0xff]
    %v828 = vld [vmem:[#allocation8 + $0x360] sm:$0xff]
    %v829 = vld [vmem:[#allocation8 + $0x368] sm:$0xff]
    %v830 = vld [vmem:[#allocation8 + $0x370] sm:$0xff]
    %v831 = vld [vmem:[#allocation8 + $0x378] sm:$0xff]
    %v832 = vld [vmem:[#allocation8 + $0x380] sm:$0xff]
    %v833 = vld [vmem:[#allocation8 + $0x388] sm:$0xff]
    %v834 = vld [vmem:[#allocation8 + $0x390] sm:$0xff]
    %v835 = vld [vmem:[#allocation8 + $0x398] sm:$0xff]
    %v836 = vld [vmem:[#allocation8 + $0x3a0] sm:$0xff]
    %v837 = vld [vmem:[#allocation8 + $0x3a8] sm:$0xff]
    %v838 = vld [vmem:[#allocation8 + $0x3b0] sm:$0xff]
    %v839 = vld [vmem:[#allocation8 + $0x3b8] sm:$0xff]
    %v840 = vld [vmem:[#allocation8 + $0x3c0] sm:$0xff]
    %v841 = vld [vmem:[#allocation8 + $0x3c8] sm:$0xff]
    %v842 = vld [vmem:[#allocation8 + $0x3d0] sm:$0xff]
    %v843 = vld [vmem:[#allocation8 + $0x3d8] sm:$0xff]
    %v844 = vld [vmem:[#allocation8 + $0x3e0] sm:$0xff]
    %v845 = vld [vmem:[#allocation8 + $0x3e8] sm:$0xff]
    %v846 = vld [vmem:[#allocation8 + $0x3f0] sm:$0xff]
    %v847 = vld [vmem:[#allocation8 + $0x3f8] sm:$0xff]
    %v848 = vld [vmem:[#allocation8 + $0x400] sm:$0xff]
    %v849 = vld [vmem:[#allocation8 + $0x408] sm:$0xff]
    %v850 = vld [vmem:[#allocation8 + $0x410] sm:$0xff]
    %v851 = vld [vmem:[#allocation8 + $0x418] sm:$0xff]
    %v852 = vld [vmem:[#allocation8 + $0x420] sm:$0xff]
    %v853 = vld [vmem:[#allocation8 + $0x428] sm:$0xff]
    %v854 = vld [vmem:[#allocation8 + $0x430] sm:$0xff]
    %v855 = vld [vmem:[#allocation8 + $0x438] sm:$0xff]
    %v856 = vld [vmem:[#allocation8 + $0x440] sm:$0xff]
    %v857 = vld [vmem:[#allocation8 + $0x448] sm:$0xff]
    %v858 = vld [vmem:[#allocation8 + $0x450] sm:$0xff]
    %v859 = vld [vmem:[#allocation8 + $0x458] sm:$0xff]
    %v860 = vld [vmem:[#allocation8 + $0x460] sm:$0xff]
    %v861 = vld [vmem:[#allocation8 + $0x468] sm:$0xff]
    %v862 = vld [vmem:[#allocation8 + $0x470] sm:$0xff]
    %v863 = vld [vmem:[#allocation8 + $0x478] sm:$0xff]
    %v864 = vld [vmem:[#allocation8 + $0x480] sm:$0xff]
    %v865 = vld [vmem:[#allocation8 + $0x488] sm:$0xff]
    %v866 = vld [vmem:[#allocation8 + $0x490] sm:$0xff]
    %v867 = vld [vmem:[#allocation8 + $0x498] sm:$0xff]
    %v868 = vld [vmem:[#allocation8 + $0x4a0] sm:$0xff]
    %v869 = vld [vmem:[#allocation8 + $0x4a8] sm:$0xff]
    %v870 = vld [vmem:[#allocation8 + $0x4b0] sm:$0xff]
    %v871 = vld [vmem:[#allocation8 + $0x4b8] sm:$0xff]
    %v872 = vld [vmem:[#allocation8 + $0x4c0] sm:$0xff]
    %v873 = vld [vmem:[#allocation8 + $0x4c8] sm:$0xff]
    %v874 = vld [vmem:[#allocation8 + $0x4d0] sm:$0xff]
    %v875 = vld [vmem:[#allocation8 + $0x4d8] sm:$0xff]
    %v876 = vld [vmem:[#allocation8 + $0x4e0] sm:$0xff]
    %v877 = vld [vmem:[#allocation8 + $0x4e8] sm:$0xff]
    %v878 = vld [vmem:[#allocation8 + $0x4f0] sm:$0xff]
    %v879 = vld [vmem:[#allocation8 + $0x4f8] sm:$0xff]
    %v880 = vld [vmem:[#allocation8 + $0x500] sm:$0xff]
    %v881 = vld [vmem:[#allocation8 + $0x508] sm:$0xff]
    %v882 = vld [vmem:[#allocation8 + $0x510] sm:$0xff]
    %v883 = vld [vmem:[#allocation8 + $0x518] sm:$0xff]
    %v884 = vld [vmem:[#allocation8 + $0x520] sm:$0xff]
    %v885 = vld [vmem:[#allocation8 + $0x528] sm:$0xff]
    %v886 = vld [vmem:[#allocation8 + $0x530] sm:$0xff]
    %v887 = vld [vmem:[#allocation8 + $0x538] sm:$0xff]
    %v888 = vld [vmem:[#allocation8 + $0x540] sm:$0xff]
    %v889 = vld [vmem:[#allocation8 + $0x548] sm:$0xff]
    %v890 = vld [vmem:[#allocation8 + $0x550] sm:$0xff]
    %v891 = vld [vmem:[#allocation8 + $0x558] sm:$0xff]
    %v892 = vld [vmem:[#allocation8 + $0x560] sm:$0xff]
    %v893 = vld [vmem:[#allocation8 + $0x568] sm:$0xff]
    %v894 = vld [vmem:[#allocation8 + $0x570] sm:$0xff]
    %v895 = vld [vmem:[#allocation8 + $0x578] sm:$0xff]
    %v896 = vld [vmem:[#allocation8 + $0x580] sm:$0xff]
    %v897 = vld [vmem:[#allocation8 + $0x588] sm:$0xff]
    %v898 = vld [vmem:[#allocation8 + $0x590] sm:$0xff]
    %v899 = vld [vmem:[#allocation8 + $0x598] sm:$0xff]
    %v900 = vld [vmem:[#allocation8 + $0x5a0] sm:$0xff]
    %v901 = vld [vmem:[#allocation8 + $0x5a8] sm:$0xff]
    %v902 = vld [vmem:[#allocation8 + $0x5b0] sm:$0xff]
    %v903 = vld [vmem:[#allocation8 + $0x5b8] sm:$0xff]
    %v904 = vld [vmem:[#allocation8 + $0x5c0] sm:$0xff]
    %v905 = vld [vmem:[#allocation8 + $0x5c8] sm:$0xff]
    %v906 = vld [vmem:[#allocation8 + $0x5d0] sm:$0xff]
    %v907 = vld [vmem:[#allocation8 + $0x5d8] sm:$0xff]
    %v908 = vld [vmem:[#allocation8 + $0x5e0] sm:$0xff]
    %v909 = vld [vmem:[#allocation8 + $0x5e8] sm:$0xff]
    %v910 = vld [vmem:[#allocation8 + $0x5f0] sm:$0xff]
    %v911 = vld [vmem:[#allocation8 + $0x5f8] sm:$0xff]
    %v912 = vld [vmem:[#allocation8 + $0x600] sm:$0xff]
    %v913 = vld [vmem:[#allocation8 + $0x608] sm:$0xff]
    %v914 = vld [vmem:[#allocation8 + $0x610] sm:$0xff]
    %v915 = vld [vmem:[#allocation8 + $0x618] sm:$0xff]
    %v916 = vld [vmem:[#allocation8 + $0x620] sm:$0xff]
    %v917 = vld [vmem:[#allocation8 + $0x628] sm:$0xff]
    %v918 = vld [vmem:[#allocation8 + $0x630] sm:$0xff]
    %v919 = vld [vmem:[#allocation8 + $0x638] sm:$0xff]
    %v920 = vld [vmem:[#allocation8 + $0x640] sm:$0xff]
    %v921 = vld [vmem:[#allocation8 + $0x648] sm:$0xff]
    %v922 = vld [vmem:[#allocation8 + $0x650] sm:$0xff]
    %v923 = vld [vmem:[#allocation8 + $0x658] sm:$0xff]
    %v924 = vld [vmem:[#allocation8 + $0x660] sm:$0xff]
    %v925 = vld [vmem:[#allocation8 + $0x668] sm:$0xff]
    %v926 = vld [vmem:[#allocation8 + $0x670] sm:$0xff]
    %v927 = vld [vmem:[#allocation8 + $0x678] sm:$0xff]
    %v928 = vld [vmem:[#allocation8 + $0x680] sm:$0xff]
    %v929 = vld [vmem:[#allocation8 + $0x688] sm:$0xff]
    %v930 = vld [vmem:[#allocation8 + $0x690] sm:$0xff]
    %v931 = vld [vmem:[#allocation8 + $0x698] sm:$0xff]
    %v932 = vld [vmem:[#allocation8 + $0x6a0] sm:$0xff]
    %v933 = vld [vmem:[#allocation8 + $0x6a8] sm:$0xff]
    %v934 = vld [vmem:[#allocation8 + $0x6b0] sm:$0xff]
    %v935 = vld [vmem:[#allocation8 + $0x6b8] sm:$0xff]
    %v936 = vld [vmem:[#allocation8 + $0x6c0] sm:$0xff]
    %v937 = vld [vmem:[#allocation8 + $0x6c8] sm:$0xff]
    %v938 = vld [vmem:[#allocation8 + $0x6d0] sm:$0xff]
    %v939 = vld [vmem:[#allocation8 + $0x6d8] sm:$0xff]
    %v940 = vld [vmem:[#allocation8 + $0x6e0] sm:$0xff]
    %v941 = vld [vmem:[#allocation8 + $0x6e8] sm:$0xff]
    %v942 = vld [vmem:[#allocation8 + $0x6f0] sm:$0xff]
    %v943 = vld [vmem:[#allocation8 + $0x6f8] sm:$0xff]
    %v944 = vld [vmem:[#allocation8 + $0x700] sm:$0xff]
    %v945 = vld [vmem:[#allocation8 + $0x708] sm:$0xff]
    %v946 = vld [vmem:[#allocation8 + $0x710] sm:$0xff]
    %v947 = vld [vmem:[#allocation8 + $0x718] sm:$0xff]
    %v948 = vld [vmem:[#allocation8 + $0x720] sm:$0xff]
    %v949 = vld [vmem:[#allocation8 + $0x728] sm:$0xff]
    %v950 = vld [vmem:[#allocation8 + $0x730] sm:$0xff]
    %v951 = vld [vmem:[#allocation8 + $0x738] sm:$0xff]
    %v952 = vld [vmem:[#allocation8 + $0x740] sm:$0xff]
    %v953 = vld [vmem:[#allocation8 + $0x748] sm:$0xff]
    %v954 = vld [vmem:[#allocation8 + $0x750] sm:$0xff]
    %v955 = vld [vmem:[#allocation8 + $0x758] sm:$0xff]
    %v956 = vld [vmem:[#allocation8 + $0x760] sm:$0xff]
    %v957 = vld [vmem:[#allocation8 + $0x768] sm:$0xff]
    %v958 = vld [vmem:[#allocation8 + $0x770] sm:$0xff]
    %v959 = vld [vmem:[#allocation8 + $0x778] sm:$0xff]
    %v960 = vld [vmem:[#allocation8 + $0x780] sm:$0xff]
    %v961 = vld [vmem:[#allocation8 + $0x788] sm:$0xff]
    %v962 = vld [vmem:[#allocation8 + $0x790] sm:$0xff]
    %v963 = vld [vmem:[#allocation8 + $0x798] sm:$0xff]
    %v964 = vld [vmem:[#allocation8 + $0x7a0] sm:$0xff]
    %v965 = vld [vmem:[#allocation8 + $0x7a8] sm:$0xff]
    %v966 = vld [vmem:[#allocation8 + $0x7b0] sm:$0xff]
    %v967 = vld [vmem:[#allocation8 + $0x7b8] sm:$0xff]
    %v968 = vld [vmem:[#allocation8 + $0x7c0] sm:$0xff]
    %v969 = vld [vmem:[#allocation8 + $0x7c8] sm:$0xff]
    %v970 = vld [vmem:[#allocation8 + $0x7d0] sm:$0xff]
    %v971 = vld [vmem:[#allocation8 + $0x7d8] sm:$0xff]
    %v972 = vld [vmem:[#allocation8 + $0x7e0] sm:$0xff]
    %v973 = vld [vmem:[#allocation8 + $0x7e8] sm:$0xff]
    %v974 = vld [vmem:[#allocation8 + $0x7f0] sm:$0xff]
    %v975 = vld [vmem:[#allocation8 + $0x7f8] sm:$0xff]
    %v976 = vld [vmem:[%s6] sm:$0xff]
    %v978 = vlaneseq
    %v979 = vshrl.u32 %v978, 7
    %v980 = vsub.s32 0, %v979
    %v981 = vrot.slane %v976, %v980
    %v982 = vlaneseq
    %v983 = vshrl.u32 %v982, 7
    %v984 = vsub.s32 1, %v983
    %v985 = vrot.slane %v976, %v984
    %v986 = vlaneseq
    %v987 = vshrl.u32 %v986, 7
    %v988 = vsub.s32 2, %v987
    %v989 = vrot.slane %v976, %v988
    %v990 = vlaneseq
    %v991 = vshrl.u32 %v990, 7
    %v992 = vsub.s32 3, %v991
    %v993 = vrot.slane %v976, %v992
    %v994 = vlaneseq
    %v995 = vshrl.u32 %v994, 7
    %v996 = vsub.s32 4, %v995
    %v997 = vrot.slane %v976, %v996
    %v998 = vlaneseq
    %v999 = vshrl.u32 %v998, 7
    %v1000 = vsub.s32 5, %v999
    %v1001 = vrot.slane %v976, %v1000
    %v1002 = vlaneseq
    %v1003 = vshrl.u32 %v1002, 7
    %v1004 = vsub.s32 6, %v1003
    %v1005 = vrot.slane %v976, %v1004
    %v1006 = vlaneseq
    %v1007 = vshrl.u32 %v1006, 7
    %v1008 = vsub.s32 7, %v1007
    %v1009 = vrot.slane %v976, %v1008
    %v1274 = vunpack.c.l.b16 %v720
    %v1275 = vunpack.c.h.b16 %v720
    %v1276 = vunpack.c.l.b16 %v721
    %v1277 = vunpack.c.h.b16 %v721
    %v1278 = vunpack.c.l.b16 %v722
    %v1279 = vunpack.c.h.b16 %v722
    %v1280 = vunpack.c.l.b16 %v723
    %v1281 = vunpack.c.h.b16 %v723
    %v1282 = vunpack.c.l.b16 %v724
    %v1283 = vunpack.c.h.b16 %v724
    %v1284 = vunpack.c.l.b16 %v725
    %v1285 = vunpack.c.h.b16 %v725
    %v1286 = vunpack.c.l.b16 %v726
    %v1287 = vunpack.c.h.b16 %v726
    %v1288 = vunpack.c.l.b16 %v727
    %v1289 = vunpack.c.h.b16 %v727
    %v1290 = vunpack.c.l.b16 %v728
    %v1291 = vunpack.c.h.b16 %v728
    %v1292 = vunpack.c.l.b16 %v729
    %v1293 = vunpack.c.h.b16 %v729
    %v1294 = vunpack.c.l.b16 %v730
    %v1295 = vunpack.c.h.b16 %v730
    %v1296 = vunpack.c.l.b16 %v731
    %v1297 = vunpack.c.h.b16 %v731
    %v1298 = vunpack.c.l.b16 %v732
    %v1299 = vunpack.c.h.b16 %v732
    %v1300 = vunpack.c.l.b16 %v733
    %v1301 = vunpack.c.h.b16 %v733
    %v1302 = vunpack.c.l.b16 %v734
    %v1303 = vunpack.c.h.b16 %v734
    %v1304 = vunpack.c.l.b16 %v735
    %v1305 = vunpack.c.h.b16 %v735
    %v1306 = vunpack.c.l.b16 %v736
    %v1307 = vunpack.c.h.b16 %v736
    %v1308 = vunpack.c.l.b16 %v737
    %v1309 = vunpack.c.h.b16 %v737
    %v1310 = vunpack.c.l.b16 %v738
    %v1311 = vunpack.c.h.b16 %v738
    %v1312 = vunpack.c.l.b16 %v739
    %v1313 = vunpack.c.h.b16 %v739
    %v1314 = vunpack.c.l.b16 %v740
    %v1315 = vunpack.c.h.b16 %v740
    %v1316 = vunpack.c.l.b16 %v741
    %v1317 = vunpack.c.h.b16 %v741
    %v1318 = vunpack.c.l.b16 %v742
    %v1319 = vunpack.c.h.b16 %v742
    %v1320 = vunpack.c.l.b16 %v743
    %v1321 = vunpack.c.h.b16 %v743
    %v1322 = vunpack.c.l.b16 %v744
    %v1323 = vunpack.c.h.b16 %v744
    %v1324 = vunpack.c.l.b16 %v745
    %v1325 = vunpack.c.h.b16 %v745
    %v1326 = vunpack.c.l.b16 %v746
    %v1327 = vunpack.c.h.b16 %v746
    %v1328 = vunpack.c.l.b16 %v747
    %v1329 = vunpack.c.h.b16 %v747
    %v1330 = vunpack.c.l.b16 %v748
    %v1331 = vunpack.c.h.b16 %v748
    %v1332 = vunpack.c.l.b16 %v749
    %v1333 = vunpack.c.h.b16 %v749
    %v1334 = vunpack.c.l.b16 %v750
    %v1335 = vunpack.c.h.b16 %v750
    %v1336 = vunpack.c.l.b16 %v751
    %v1337 = vunpack.c.h.b16 %v751
    %v1338 = vunpack.c.l.b16 %v752
    %v1339 = vunpack.c.h.b16 %v752
    %v1340 = vunpack.c.l.b16 %v753
    %v1341 = vunpack.c.h.b16 %v753
    %v1342 = vunpack.c.l.b16 %v754
    %v1343 = vunpack.c.h.b16 %v754
    %v1344 = vunpack.c.l.b16 %v755
    %v1345 = vunpack.c.h.b16 %v755
    %v1346 = vunpack.c.l.b16 %v756
    %v1347 = vunpack.c.h.b16 %v756
    %v1348 = vunpack.c.l.b16 %v757
    %v1349 = vunpack.c.h.b16 %v757
    %v1350 = vunpack.c.l.b16 %v758
    %v1351 = vunpack.c.h.b16 %v758
    %v1352 = vunpack.c.l.b16 %v759
    %v1353 = vunpack.c.h.b16 %v759
    %v1354 = vunpack.c.l.b16 %v760
    %v1355 = vunpack.c.h.b16 %v760
    %v1356 = vunpack.c.l.b16 %v761
    %v1357 = vunpack.c.h.b16 %v761
    %v1358 = vunpack.c.l.b16 %v762
    %v1359 = vunpack.c.h.b16 %v762
    %v1360 = vunpack.c.l.b16 %v763
    %v1361 = vunpack.c.h.b16 %v763
    %v1362 = vunpack.c.l.b16 %v764
    %v1363 = vunpack.c.h.b16 %v764
    %v1364 = vunpack.c.l.b16 %v765
    %v1365 = vunpack.c.h.b16 %v765
    %v1366 = vunpack.c.l.b16 %v766
    %v1367 = vunpack.c.h.b16 %v766
    %v1368 = vunpack.c.l.b16 %v767
    %v1369 = vunpack.c.h.b16 %v767
    %v1370 = vunpack.c.l.b16 %v768
    %v1371 = vunpack.c.h.b16 %v768
    %v1372 = vunpack.c.l.b16 %v769
    %v1373 = vunpack.c.h.b16 %v769
    %v1374 = vunpack.c.l.b16 %v770
    %v1375 = vunpack.c.h.b16 %v770
    %v1376 = vunpack.c.l.b16 %v771
    %v1377 = vunpack.c.h.b16 %v771
    %v1378 = vunpack.c.l.b16 %v772
    %v1379 = vunpack.c.h.b16 %v772
    %v1380 = vunpack.c.l.b16 %v773
    %v1381 = vunpack.c.h.b16 %v773
    %v1382 = vunpack.c.l.b16 %v774
    %v1383 = vunpack.c.h.b16 %v774
    %v1384 = vunpack.c.l.b16 %v775
    %v1385 = vunpack.c.h.b16 %v775
    %v1386 = vunpack.c.l.b16 %v776
    %v1387 = vunpack.c.h.b16 %v776
    %v1388 = vunpack.c.l.b16 %v777
    %v1389 = vunpack.c.h.b16 %v777
    %v1390 = vunpack.c.l.b16 %v778
    %v1391 = vunpack.c.h.b16 %v778
    %v1392 = vunpack.c.l.b16 %v779
    %v1393 = vunpack.c.h.b16 %v779
    %v1394 = vunpack.c.l.b16 %v780
    %v1395 = vunpack.c.h.b16 %v780
    %v1396 = vunpack.c.l.b16 %v781
    %v1397 = vunpack.c.h.b16 %v781
    %v1398 = vunpack.c.l.b16 %v782
    %v1399 = vunpack.c.h.b16 %v782
    %v1400 = vunpack.c.l.b16 %v783
    %v1401 = vunpack.c.h.b16 %v783
    %v1402 = vunpack.c.l.b16 %v784
    %v1403 = vunpack.c.h.b16 %v784
    %v1404 = vunpack.c.l.b16 %v785
    %v1405 = vunpack.c.h.b16 %v785
    %v1406 = vunpack.c.l.b16 %v786
    %v1407 = vunpack.c.h.b16 %v786
    %v1408 = vunpack.c.l.b16 %v787
    %v1409 = vunpack.c.h.b16 %v787
    %v1410 = vunpack.c.l.b16 %v788
    %v1411 = vunpack.c.h.b16 %v788
    %v1412 = vunpack.c.l.b16 %v789
    %v1413 = vunpack.c.h.b16 %v789
    %v1414 = vunpack.c.l.b16 %v790
    %v1415 = vunpack.c.h.b16 %v790
    %v1416 = vunpack.c.l.b16 %v791
    %v1417 = vunpack.c.h.b16 %v791
    %v1418 = vunpack.c.l.b16 %v792
    %v1419 = vunpack.c.h.b16 %v792
    %v1420 = vunpack.c.l.b16 %v793
    %v1421 = vunpack.c.h.b16 %v793
    %v1422 = vunpack.c.l.b16 %v794
    %v1423 = vunpack.c.h.b16 %v794
    %v1424 = vunpack.c.l.b16 %v795
    %v1425 = vunpack.c.h.b16 %v795
    %v1426 = vunpack.c.l.b16 %v796
    %v1427 = vunpack.c.h.b16 %v796
    %v1428 = vunpack.c.l.b16 %v797
    %v1429 = vunpack.c.h.b16 %v797
    %v1430 = vunpack.c.l.b16 %v798
    %v1431 = vunpack.c.h.b16 %v798
    %v1432 = vunpack.c.l.b16 %v799
    %v1433 = vunpack.c.h.b16 %v799
    %v1434 = vunpack.c.l.b16 %v800
    %v1435 = vunpack.c.h.b16 %v800
    %v1436 = vunpack.c.l.b16 %v801
    %v1437 = vunpack.c.h.b16 %v801
    %v1438 = vunpack.c.l.b16 %v802
    %v1439 = vunpack.c.h.b16 %v802
    %v1440 = vunpack.c.l.b16 %v803
    %v1441 = vunpack.c.h.b16 %v803
    %v1442 = vunpack.c.l.b16 %v804
    %v1443 = vunpack.c.h.b16 %v804
    %v1444 = vunpack.c.l.b16 %v805
    %v1445 = vunpack.c.h.b16 %v805
    %v1446 = vunpack.c.l.b16 %v806
    %v1447 = vunpack.c.h.b16 %v806
    %v1448 = vunpack.c.l.b16 %v807
    %v1449 = vunpack.c.h.b16 %v807
    %v1450 = vunpack.c.l.b16 %v808
    %v1451 = vunpack.c.h.b16 %v808
    %v1452 = vunpack.c.l.b16 %v809
    %v1453 = vunpack.c.h.b16 %v809
    %v1454 = vunpack.c.l.b16 %v810
    %v1455 = vunpack.c.h.b16 %v810
    %v1456 = vunpack.c.l.b16 %v811
    %v1457 = vunpack.c.h.b16 %v811
    %v1458 = vunpack.c.l.b16 %v812
    %v1459 = vunpack.c.h.b16 %v812
    %v1460 = vunpack.c.l.b16 %v813
    %v1461 = vunpack.c.h.b16 %v813
    %v1462 = vunpack.c.l.b16 %v814
    %v1463 = vunpack.c.h.b16 %v814
    %v1464 = vunpack.c.l.b16 %v815
    %v1465 = vunpack.c.h.b16 %v815
    %v1466 = vunpack.c.l.b16 %v816
    %v1467 = vunpack.c.h.b16 %v816
    %v1468 = vunpack.c.l.b16 %v817
    %v1469 = vunpack.c.h.b16 %v817
    %v1470 = vunpack.c.l.b16 %v818
    %v1471 = vunpack.c.h.b16 %v818
    %v1472 = vunpack.c.l.b16 %v819
    %v1473 = vunpack.c.h.b16 %v819
    %v1474 = vunpack.c.l.b16 %v820
    %v1475 = vunpack.c.h.b16 %v820
    %v1476 = vunpack.c.l.b16 %v821
    %v1477 = vunpack.c.h.b16 %v821
    %v1478 = vunpack.c.l.b16 %v822
    %v1479 = vunpack.c.h.b16 %v822
    %v1480 = vunpack.c.l.b16 %v823
    %v1481 = vunpack.c.h.b16 %v823
    %v1482 = vunpack.c.l.b16 %v824
    %v1483 = vunpack.c.h.b16 %v824
    %v1484 = vunpack.c.l.b16 %v825
    %v1485 = vunpack.c.h.b16 %v825
    %v1486 = vunpack.c.l.b16 %v826
    %v1487 = vunpack.c.h.b16 %v826
    %v1488 = vunpack.c.l.b16 %v827
    %v1489 = vunpack.c.h.b16 %v827
    %v1490 = vunpack.c.l.b16 %v828
    %v1491 = vunpack.c.h.b16 %v828
    %v1492 = vunpack.c.l.b16 %v829
    %v1493 = vunpack.c.h.b16 %v829
    %v1494 = vunpack.c.l.b16 %v830
    %v1495 = vunpack.c.h.b16 %v830
    %v1496 = vunpack.c.l.b16 %v831
    %v1497 = vunpack.c.h.b16 %v831
    %v1498 = vunpack.c.l.b16 %v832
    %v1499 = vunpack.c.h.b16 %v832
    %v1500 = vunpack.c.l.b16 %v833
    %v1501 = vunpack.c.h.b16 %v833
    %v1502 = vunpack.c.l.b16 %v834
    %v1503 = vunpack.c.h.b16 %v834
    %v1504 = vunpack.c.l.b16 %v835
    %v1505 = vunpack.c.h.b16 %v835
    %v1506 = vunpack.c.l.b16 %v836
    %v1507 = vunpack.c.h.b16 %v836
    %v1508 = vunpack.c.l.b16 %v837
    %v1509 = vunpack.c.h.b16 %v837
    %v1510 = vunpack.c.l.b16 %v838
    %v1511 = vunpack.c.h.b16 %v838
    %v1512 = vunpack.c.l.b16 %v839
    %v1513 = vunpack.c.h.b16 %v839
    %v1514 = vunpack.c.l.b16 %v840
    %v1515 = vunpack.c.h.b16 %v840
    %v1516 = vunpack.c.l.b16 %v841
    %v1517 = vunpack.c.h.b16 %v841
    %v1518 = vunpack.c.l.b16 %v842
    %v1519 = vunpack.c.h.b16 %v842
    %v1520 = vunpack.c.l.b16 %v843
    %v1521 = vunpack.c.h.b16 %v843
    %v1522 = vunpack.c.l.b16 %v844
    %v1523 = vunpack.c.h.b16 %v844
    %v1524 = vunpack.c.l.b16 %v845
    %v1525 = vunpack.c.h.b16 %v845
    %v1526 = vunpack.c.l.b16 %v846
    %v1527 = vunpack.c.h.b16 %v846
    %v1528 = vunpack.c.l.b16 %v847
    %v1529 = vunpack.c.h.b16 %v847
    %v1530 = vunpack.c.l.b16 %v848
    %v1531 = vunpack.c.h.b16 %v848
    %v1532 = vunpack.c.l.b16 %v849
    %v1533 = vunpack.c.h.b16 %v849
    %v1534 = vunpack.c.l.b16 %v850
    %v1535 = vunpack.c.h.b16 %v850
    %v1536 = vunpack.c.l.b16 %v851
    %v1537 = vunpack.c.h.b16 %v851
    %v1538 = vunpack.c.l.b16 %v852
    %v1539 = vunpack.c.h.b16 %v852
    %v1540 = vunpack.c.l.b16 %v853
    %v1541 = vunpack.c.h.b16 %v853
    %v1542 = vunpack.c.l.b16 %v854
    %v1543 = vunpack.c.h.b16 %v854
    %v1544 = vunpack.c.l.b16 %v855
    %v1545 = vunpack.c.h.b16 %v855
    %v1546 = vunpack.c.l.b16 %v856
    %v1547 = vunpack.c.h.b16 %v856
    %v1548 = vunpack.c.l.b16 %v857
    %v1549 = vunpack.c.h.b16 %v857
    %v1550 = vunpack.c.l.b16 %v858
    %v1551 = vunpack.c.h.b16 %v858
    %v1552 = vunpack.c.l.b16 %v859
    %v1553 = vunpack.c.h.b16 %v859
    %v1554 = vunpack.c.l.b16 %v860
    %v1555 = vunpack.c.h.b16 %v860
    %v1556 = vunpack.c.l.b16 %v861
    %v1557 = vunpack.c.h.b16 %v861
    %v1558 = vunpack.c.l.b16 %v862
    %v1559 = vunpack.c.h.b16 %v862
    %v1560 = vunpack.c.l.b16 %v863
    %v1561 = vunpack.c.h.b16 %v863
    %v1562 = vunpack.c.l.b16 %v864
    %v1563 = vunpack.c.h.b16 %v864
    %v1564 = vunpack.c.l.b16 %v865
    %v1565 = vunpack.c.h.b16 %v865
    %v1566 = vunpack.c.l.b16 %v866
    %v1567 = vunpack.c.h.b16 %v866
    %v1568 = vunpack.c.l.b16 %v867
    %v1569 = vunpack.c.h.b16 %v867
    %v1570 = vunpack.c.l.b16 %v868
    %v1571 = vunpack.c.h.b16 %v868
    %v1572 = vunpack.c.l.b16 %v869
    %v1573 = vunpack.c.h.b16 %v869
    %v1574 = vunpack.c.l.b16 %v870
    %v1575 = vunpack.c.h.b16 %v870
    %v1576 = vunpack.c.l.b16 %v871
    %v1577 = vunpack.c.h.b16 %v871
    %v1578 = vunpack.c.l.b16 %v872
    %v1579 = vunpack.c.h.b16 %v872
    %v1580 = vunpack.c.l.b16 %v873
    %v1581 = vunpack.c.h.b16 %v873
    %v1582 = vunpack.c.l.b16 %v874
    %v1583 = vunpack.c.h.b16 %v874
    %v1584 = vunpack.c.l.b16 %v875
    %v1585 = vunpack.c.h.b16 %v875
    %v1586 = vunpack.c.l.b16 %v876
    %v1587 = vunpack.c.h.b16 %v876
    %v1588 = vunpack.c.l.b16 %v877
    %v1589 = vunpack.c.h.b16 %v877
    %v1590 = vunpack.c.l.b16 %v878
    %v1591 = vunpack.c.h.b16 %v878
    %v1592 = vunpack.c.l.b16 %v879
    %v1593 = vunpack.c.h.b16 %v879
    %v1594 = vunpack.c.l.b16 %v880
    %v1595 = vunpack.c.h.b16 %v880
    %v1596 = vunpack.c.l.b16 %v881
    %v1597 = vunpack.c.h.b16 %v881
    %v1598 = vunpack.c.l.b16 %v882
    %v1599 = vunpack.c.h.b16 %v882
    %v1600 = vunpack.c.l.b16 %v883
    %v1601 = vunpack.c.h.b16 %v883
    %v1602 = vunpack.c.l.b16 %v884
    %v1603 = vunpack.c.h.b16 %v884
    %v1604 = vunpack.c.l.b16 %v885
    %v1605 = vunpack.c.h.b16 %v885
    %v1606 = vunpack.c.l.b16 %v886
    %v1607 = vunpack.c.h.b16 %v886
    %v1608 = vunpack.c.l.b16 %v887
    %v1609 = vunpack.c.h.b16 %v887
    %v1610 = vunpack.c.l.b16 %v888
    %v1611 = vunpack.c.h.b16 %v888
    %v1612 = vunpack.c.l.b16 %v889
    %v1613 = vunpack.c.h.b16 %v889
    %v1614 = vunpack.c.l.b16 %v890
    %v1615 = vunpack.c.h.b16 %v890
    %v1616 = vunpack.c.l.b16 %v891
    %v1617 = vunpack.c.h.b16 %v891
    %v1618 = vunpack.c.l.b16 %v892
    %v1619 = vunpack.c.h.b16 %v892
    %v1620 = vunpack.c.l.b16 %v893
    %v1621 = vunpack.c.h.b16 %v893
    %v1622 = vunpack.c.l.b16 %v894
    %v1623 = vunpack.c.h.b16 %v894
    %v1624 = vunpack.c.l.b16 %v895
    %v1625 = vunpack.c.h.b16 %v895
    %v1626 = vunpack.c.l.b16 %v896
    %v1627 = vunpack.c.h.b16 %v896
    %v1628 = vunpack.c.l.b16 %v897
    %v1629 = vunpack.c.h.b16 %v897
    %v1630 = vunpack.c.l.b16 %v898
    %v1631 = vunpack.c.h.b16 %v898
    %v1632 = vunpack.c.l.b16 %v899
    %v1633 = vunpack.c.h.b16 %v899
    %v1634 = vunpack.c.l.b16 %v900
    %v1635 = vunpack.c.h.b16 %v900
    %v1636 = vunpack.c.l.b16 %v901
    %v1637 = vunpack.c.h.b16 %v901
    %v1638 = vunpack.c.l.b16 %v902
    %v1639 = vunpack.c.h.b16 %v902
    %v1640 = vunpack.c.l.b16 %v903
    %v1641 = vunpack.c.h.b16 %v903
    %v1642 = vunpack.c.l.b16 %v904
    %v1643 = vunpack.c.h.b16 %v904
    %v1644 = vunpack.c.l.b16 %v905
    %v1645 = vunpack.c.h.b16 %v905
    %v1646 = vunpack.c.l.b16 %v906
    %v1647 = vunpack.c.h.b16 %v906
    %v1648 = vunpack.c.l.b16 %v907
    %v1649 = vunpack.c.h.b16 %v907
    %v1650 = vunpack.c.l.b16 %v908
    %v1651 = vunpack.c.h.b16 %v908
    %v1652 = vunpack.c.l.b16 %v909
    %v1653 = vunpack.c.h.b16 %v909
    %v1654 = vunpack.c.l.b16 %v910
    %v1655 = vunpack.c.h.b16 %v910
    %v1656 = vunpack.c.l.b16 %v911
    %v1657 = vunpack.c.h.b16 %v911
    %v1658 = vunpack.c.l.b16 %v912
    %v1659 = vunpack.c.h.b16 %v912
    %v1660 = vunpack.c.l.b16 %v913
    %v1661 = vunpack.c.h.b16 %v913
    %v1662 = vunpack.c.l.b16 %v914
    %v1663 = vunpack.c.h.b16 %v914
    %v1664 = vunpack.c.l.b16 %v915
    %v1665 = vunpack.c.h.b16 %v915
    %v1666 = vunpack.c.l.b16 %v916
    %v1667 = vunpack.c.h.b16 %v916
    %v1668 = vunpack.c.l.b16 %v917
    %v1669 = vunpack.c.h.b16 %v917
    %v1670 = vunpack.c.l.b16 %v918
    %v1671 = vunpack.c.h.b16 %v918
    %v1672 = vunpack.c.l.b16 %v919
    %v1673 = vunpack.c.h.b16 %v919
    %v1674 = vunpack.c.l.b16 %v920
    %v1675 = vunpack.c.h.b16 %v920
    %v1676 = vunpack.c.l.b16 %v921
    %v1677 = vunpack.c.h.b16 %v921
    %v1678 = vunpack.c.l.b16 %v922
    %v1679 = vunpack.c.h.b16 %v922
    %v1680 = vunpack.c.l.b16 %v923
    %v1681 = vunpack.c.h.b16 %v923
    %v1682 = vunpack.c.l.b16 %v924
    %v1683 = vunpack.c.h.b16 %v924
    %v1684 = vunpack.c.l.b16 %v925
    %v1685 = vunpack.c.h.b16 %v925
    %v1686 = vunpack.c.l.b16 %v926
    %v1687 = vunpack.c.h.b16 %v926
    %v1688 = vunpack.c.l.b16 %v927
    %v1689 = vunpack.c.h.b16 %v927
    %v1690 = vunpack.c.l.b16 %v928
    %v1691 = vunpack.c.h.b16 %v928
    %v1692 = vunpack.c.l.b16 %v929
    %v1693 = vunpack.c.h.b16 %v929
    %v1694 = vunpack.c.l.b16 %v930
    %v1695 = vunpack.c.h.b16 %v930
    %v1696 = vunpack.c.l.b16 %v931
    %v1697 = vunpack.c.h.b16 %v931
    %v1698 = vunpack.c.l.b16 %v932
    %v1699 = vunpack.c.h.b16 %v932
    %v1700 = vunpack.c.l.b16 %v933
    %v1701 = vunpack.c.h.b16 %v933
    %v1702 = vunpack.c.l.b16 %v934
    %v1703 = vunpack.c.h.b16 %v934
    %v1704 = vunpack.c.l.b16 %v935
    %v1705 = vunpack.c.h.b16 %v935
    %v1706 = vunpack.c.l.b16 %v936
    %v1707 = vunpack.c.h.b16 %v936
    %v1708 = vunpack.c.l.b16 %v937
    %v1709 = vunpack.c.h.b16 %v937
    %v1710 = vunpack.c.l.b16 %v938
    %v1711 = vunpack.c.h.b16 %v938
    %v1712 = vunpack.c.l.b16 %v939
    %v1713 = vunpack.c.h.b16 %v939
    %v1714 = vunpack.c.l.b16 %v940
    %v1715 = vunpack.c.h.b16 %v940
    %v1716 = vunpack.c.l.b16 %v941
    %v1717 = vunpack.c.h.b16 %v941
    %v1718 = vunpack.c.l.b16 %v942
    %v1719 = vunpack.c.h.b16 %v942
    %v1720 = vunpack.c.l.b16 %v943
    %v1721 = vunpack.c.h.b16 %v943
    %v1722 = vunpack.c.l.b16 %v944
    %v1723 = vunpack.c.h.b16 %v944
    %v1724 = vunpack.c.l.b16 %v945
    %v1725 = vunpack.c.h.b16 %v945
    %v1726 = vunpack.c.l.b16 %v946
    %v1727 = vunpack.c.h.b16 %v946
    %v1728 = vunpack.c.l.b16 %v947
    %v1729 = vunpack.c.h.b16 %v947
    %v1730 = vunpack.c.l.b16 %v948
    %v1731 = vunpack.c.h.b16 %v948
    %v1732 = vunpack.c.l.b16 %v949
    %v1733 = vunpack.c.h.b16 %v949
    %v1734 = vunpack.c.l.b16 %v950
    %v1735 = vunpack.c.h.b16 %v950
    %v1736 = vunpack.c.l.b16 %v951
    %v1737 = vunpack.c.h.b16 %v951
    %v1738 = vunpack.c.l.b16 %v952
    %v1739 = vunpack.c.h.b16 %v952
    %v1740 = vunpack.c.l.b16 %v953
    %v1741 = vunpack.c.h.b16 %v953
    %v1742 = vunpack.c.l.b16 %v954
    %v1743 = vunpack.c.h.b16 %v954
    %v1744 = vunpack.c.l.b16 %v955
    %v1745 = vunpack.c.h.b16 %v955
    %v1746 = vunpack.c.l.b16 %v956
    %v1747 = vunpack.c.h.b16 %v956
    %v1748 = vunpack.c.l.b16 %v957
    %v1749 = vunpack.c.h.b16 %v957
    %v1750 = vunpack.c.l.b16 %v958
    %v1751 = vunpack.c.h.b16 %v958
    %v1752 = vunpack.c.l.b16 %v959
    %v1753 = vunpack.c.h.b16 %v959
    %v1754 = vunpack.c.l.b16 %v960
    %v1755 = vunpack.c.h.b16 %v960
    %v1756 = vunpack.c.l.b16 %v961
    %v1757 = vunpack.c.h.b16 %v961
    %v1758 = vunpack.c.l.b16 %v962
    %v1759 = vunpack.c.h.b16 %v962
    %v1760 = vunpack.c.l.b16 %v963
    %v1761 = vunpack.c.h.b16 %v963
    %v1762 = vunpack.c.l.b16 %v964
    %v1763 = vunpack.c.h.b16 %v964
    %v1764 = vunpack.c.l.b16 %v965
    %v1765 = vunpack.c.h.b16 %v965
    %v1766 = vunpack.c.l.b16 %v966
    %v1767 = vunpack.c.h.b16 %v966
    %v1768 = vunpack.c.l.b16 %v967
    %v1769 = vunpack.c.h.b16 %v967
    %v1770 = vunpack.c.l.b16 %v968
    %v1771 = vunpack.c.h.b16 %v968
    %v1772 = vunpack.c.l.b16 %v969
    %v1773 = vunpack.c.h.b16 %v969
    %v1774 = vunpack.c.l.b16 %v970
    %v1775 = vunpack.c.h.b16 %v970
    %v1776 = vunpack.c.l.b16 %v971
    %v1777 = vunpack.c.h.b16 %v971
    %v1778 = vunpack.c.l.b16 %v972
    %v1779 = vunpack.c.h.b16 %v972
    %v1780 = vunpack.c.l.b16 %v973
    %v1781 = vunpack.c.h.b16 %v973
    %v1782 = vunpack.c.l.b16 %v974
    %v1783 = vunpack.c.h.b16 %v974
    %v1784 = vunpack.c.l.b16 %v975
    %v1785 = vunpack.c.h.b16 %v975
    %v1786 = vpack.c.b16 %v1282, %v1274
    %v1787 = vpack.c.b16 %v1283, %v1275
    %v1788 = vpack.c.b16 %v1284, %v1276
    %v1789 = vpack.c.b16 %v1285, %v1277
    %v1790 = vpack.c.b16 %v1286, %v1278
    %v1791 = vpack.c.b16 %v1287, %v1279
    %v1792 = vpack.c.b16 %v1288, %v1280
    %v1793 = vpack.c.b16 %v1289, %v1281
    %v1794 = vpack.c.b16 %v1298, %v1290
    %v1795 = vpack.c.b16 %v1299, %v1291
    %v1796 = vpack.c.b16 %v1300, %v1292
    %v1797 = vpack.c.b16 %v1301, %v1293
    %v1798 = vpack.c.b16 %v1302, %v1294
    %v1799 = vpack.c.b16 %v1303, %v1295
    %v1800 = vpack.c.b16 %v1304, %v1296
    %v1801 = vpack.c.b16 %v1305, %v1297
    %v1802 = vpack.c.b16 %v1314, %v1306
    %v1803 = vpack.c.b16 %v1315, %v1307
    %v1804 = vpack.c.b16 %v1316, %v1308
    %v1805 = vpack.c.b16 %v1317, %v1309
    %v1806 = vpack.c.b16 %v1318, %v1310
    %v1807 = vpack.c.b16 %v1319, %v1311
    %v1808 = vpack.c.b16 %v1320, %v1312
    %v1809 = vpack.c.b16 %v1321, %v1313
    %v1810 = vpack.c.b16 %v1330, %v1322
    %v1811 = vpack.c.b16 %v1331, %v1323
    %v1812 = vpack.c.b16 %v1332, %v1324
    %v1813 = vpack.c.b16 %v1333, %v1325
    %v1814 = vpack.c.b16 %v1334, %v1326
    %v1815 = vpack.c.b16 %v1335, %v1327
    %v1816 = vpack.c.b16 %v1336, %v1328
    %v1817 = vpack.c.b16 %v1337, %v1329
    %v1818 = vpack.c.b16 %v1346, %v1338
    %v1819 = vpack.c.b16 %v1347, %v1339
    %v1820 = vpack.c.b16 %v1348, %v1340
    %v1821 = vpack.c.b16 %v1349, %v1341
    %v1822 = vpack.c.b16 %v1350, %v1342
    %v1823 = vpack.c.b16 %v1351, %v1343
    %v1824 = vpack.c.b16 %v1352, %v1344
    %v1825 = vpack.c.b16 %v1353, %v1345
    %v1826 = vpack.c.b16 %v1362, %v1354
    %v1827 = vpack.c.b16 %v1363, %v1355
    %v1828 = vpack.c.b16 %v1364, %v1356
    %v1829 = vpack.c.b16 %v1365, %v1357
    %v1830 = vpack.c.b16 %v1366, %v1358
    %v1831 = vpack.c.b16 %v1367, %v1359
    %v1832 = vpack.c.b16 %v1368, %v1360
    %v1833 = vpack.c.b16 %v1369, %v1361
    %v1834 = vpack.c.b16 %v1378, %v1370
    %v1835 = vpack.c.b16 %v1379, %v1371
    %v1836 = vpack.c.b16 %v1380, %v1372
    %v1837 = vpack.c.b16 %v1381, %v1373
    %v1838 = vpack.c.b16 %v1382, %v1374
    %v1839 = vpack.c.b16 %v1383, %v1375
    %v1840 = vpack.c.b16 %v1384, %v1376
    %v1841 = vpack.c.b16 %v1385, %v1377
    %v1842 = vpack.c.b16 %v1394, %v1386
    %v1843 = vpack.c.b16 %v1395, %v1387
    %v1844 = vpack.c.b16 %v1396, %v1388
    %v1845 = vpack.c.b16 %v1397, %v1389
    %v1846 = vpack.c.b16 %v1398, %v1390
    %v1847 = vpack.c.b16 %v1399, %v1391
    %v1848 = vpack.c.b16 %v1400, %v1392
    %v1849 = vpack.c.b16 %v1401, %v1393
    %v1850 = vpack.c.b16 %v1410, %v1402
    %v1851 = vpack.c.b16 %v1411, %v1403
    %v1852 = vpack.c.b16 %v1412, %v1404
    %v1853 = vpack.c.b16 %v1413, %v1405
    %v1854 = vpack.c.b16 %v1414, %v1406
    %v1855 = vpack.c.b16 %v1415, %v1407
    %v1856 = vpack.c.b16 %v1416, %v1408
    %v1857 = vpack.c.b16 %v1417, %v1409
    %v1858 = vpack.c.b16 %v1426, %v1418
    %v1859 = vpack.c.b16 %v1427, %v1419
    %v1860 = vpack.c.b16 %v1428, %v1420
    %v1861 = vpack.c.b16 %v1429, %v1421
    %v1862 = vpack.c.b16 %v1430, %v1422
    %v1863 = vpack.c.b16 %v1431, %v1423
    %v1864 = vpack.c.b16 %v1432, %v1424
    %v1865 = vpack.c.b16 %v1433, %v1425
    %v1866 = vpack.c.b16 %v1442, %v1434
    %v1867 = vpack.c.b16 %v1443, %v1435
    %v1868 = vpack.c.b16 %v1444, %v1436
    %v1869 = vpack.c.b16 %v1445, %v1437
    %v1870 = vpack.c.b16 %v1446, %v1438
    %v1871 = vpack.c.b16 %v1447, %v1439
    %v1872 = vpack.c.b16 %v1448, %v1440
    %v1873 = vpack.c.b16 %v1449, %v1441
    %v1874 = vpack.c.b16 %v1458, %v1450
    %v1875 = vpack.c.b16 %v1459, %v1451
    %v1876 = vpack.c.b16 %v1460, %v1452
    %v1877 = vpack.c.b16 %v1461, %v1453
    %v1878 = vpack.c.b16 %v1462, %v1454
    %v1879 = vpack.c.b16 %v1463, %v1455
    %v1880 = vpack.c.b16 %v1464, %v1456
    %v1881 = vpack.c.b16 %v1465, %v1457
    %v1882 = vpack.c.b16 %v1474, %v1466
    %v1883 = vpack.c.b16 %v1475, %v1467
    %v1884 = vpack.c.b16 %v1476, %v1468
    %v1885 = vpack.c.b16 %v1477, %v1469
    %v1886 = vpack.c.b16 %v1478, %v1470
    %v1887 = vpack.c.b16 %v1479, %v1471
    %v1888 = vpack.c.b16 %v1480, %v1472
    %v1889 = vpack.c.b16 %v1481, %v1473
    %v1890 = vpack.c.b16 %v1490, %v1482
    %v1891 = vpack.c.b16 %v1491, %v1483
    %v1892 = vpack.c.b16 %v1492, %v1484
    %v1893 = vpack.c.b16 %v1493, %v1485
    %v1894 = vpack.c.b16 %v1494, %v1486
    %v1895 = vpack.c.b16 %v1495, %v1487
    %v1896 = vpack.c.b16 %v1496, %v1488
    %v1897 = vpack.c.b16 %v1497, %v1489
    %v1898 = vpack.c.b16 %v1506, %v1498
    %v1899 = vpack.c.b16 %v1507, %v1499
    %v1900 = vpack.c.b16 %v1508, %v1500
    %v1901 = vpack.c.b16 %v1509, %v1501
    %v1902 = vpack.c.b16 %v1510, %v1502
    %v1903 = vpack.c.b16 %v1511, %v1503
    %v1904 = vpack.c.b16 %v1512, %v1504
    %v1905 = vpack.c.b16 %v1513, %v1505
    %v1906 = vpack.c.b16 %v1522, %v1514
    %v1907 = vpack.c.b16 %v1523, %v1515
    %v1908 = vpack.c.b16 %v1524, %v1516
    %v1909 = vpack.c.b16 %v1525, %v1517
    %v1910 = vpack.c.b16 %v1526, %v1518
    %v1911 = vpack.c.b16 %v1527, %v1519
    %v1912 = vpack.c.b16 %v1528, %v1520
    %v1913 = vpack.c.b16 %v1529, %v1521
    %v1914 = vpack.c.b16 %v1538, %v1530
    %v1915 = vpack.c.b16 %v1539, %v1531
    %v1916 = vpack.c.b16 %v1540, %v1532
    %v1917 = vpack.c.b16 %v1541, %v1533
    %v1918 = vpack.c.b16 %v1542, %v1534
    %v1919 = vpack.c.b16 %v1543, %v1535
    %v1920 = vpack.c.b16 %v1544, %v1536
    %v1921 = vpack.c.b16 %v1545, %v1537
    %v1922 = vpack.c.b16 %v1554, %v1546
    %v1923 = vpack.c.b16 %v1555, %v1547
    %v1924 = vpack.c.b16 %v1556, %v1548
    %v1925 = vpack.c.b16 %v1557, %v1549
    %v1926 = vpack.c.b16 %v1558, %v1550
    %v1927 = vpack.c.b16 %v1559, %v1551
    %v1928 = vpack.c.b16 %v1560, %v1552
    %v1929 = vpack.c.b16 %v1561, %v1553
    %v1930 = vpack.c.b16 %v1570, %v1562
    %v1931 = vpack.c.b16 %v1571, %v1563
    %v1932 = vpack.c.b16 %v1572, %v1564
    %v1933 = vpack.c.b16 %v1573, %v1565
    %v1934 = vpack.c.b16 %v1574, %v1566
    %v1935 = vpack.c.b16 %v1575, %v1567
    %v1936 = vpack.c.b16 %v1576, %v1568
    %v1937 = vpack.c.b16 %v1577, %v1569
    %v1938 = vpack.c.b16 %v1586, %v1578
    %v1939 = vpack.c.b16 %v1587, %v1579
    %v1940 = vpack.c.b16 %v1588, %v1580
    %v1941 = vpack.c.b16 %v1589, %v1581
    %v1942 = vpack.c.b16 %v1590, %v1582
    %v1943 = vpack.c.b16 %v1591, %v1583
    %v1944 = vpack.c.b16 %v1592, %v1584
    %v1945 = vpack.c.b16 %v1593, %v1585
    %v1946 = vpack.c.b16 %v1602, %v1594
    %v1947 = vpack.c.b16 %v1603, %v1595
    %v1948 = vpack.c.b16 %v1604, %v1596
    %v1949 = vpack.c.b16 %v1605, %v1597
    %v1950 = vpack.c.b16 %v1606, %v1598
    %v1951 = vpack.c.b16 %v1607, %v1599
    %v1952 = vpack.c.b16 %v1608, %v1600
    %v1953 = vpack.c.b16 %v1609, %v1601
    %v1954 = vpack.c.b16 %v1618, %v1610
    %v1955 = vpack.c.b16 %v1619, %v1611
    %v1956 = vpack.c.b16 %v1620, %v1612
    %v1957 = vpack.c.b16 %v1621, %v1613
    %v1958 = vpack.c.b16 %v1622, %v1614
    %v1959 = vpack.c.b16 %v1623, %v1615
    %v1960 = vpack.c.b16 %v1624, %v1616
    %v1961 = vpack.c.b16 %v1625, %v1617
    %v1962 = vpack.c.b16 %v1634, %v1626
    %v1963 = vpack.c.b16 %v1635, %v1627
    %v1964 = vpack.c.b16 %v1636, %v1628
    %v1965 = vpack.c.b16 %v1637, %v1629
    %v1966 = vpack.c.b16 %v1638, %v1630
    %v1967 = vpack.c.b16 %v1639, %v1631
    %v1968 = vpack.c.b16 %v1640, %v1632
    %v1969 = vpack.c.b16 %v1641, %v1633
    %v1970 = vpack.c.b16 %v1650, %v1642
    %v1971 = vpack.c.b16 %v1651, %v1643
    %v1972 = vpack.c.b16 %v1652, %v1644
    %v1973 = vpack.c.b16 %v1653, %v1645
    %v1974 = vpack.c.b16 %v1654, %v1646
    %v1975 = vpack.c.b16 %v1655, %v1647
    %v1976 = vpack.c.b16 %v1656, %v1648
    %v1977 = vpack.c.b16 %v1657, %v1649
    %v1978 = vpack.c.b16 %v1666, %v1658
    %v1979 = vpack.c.b16 %v1667, %v1659
    %v1980 = vpack.c.b16 %v1668, %v1660
    %v1981 = vpack.c.b16 %v1669, %v1661
    %v1982 = vpack.c.b16 %v1670, %v1662
    %v1983 = vpack.c.b16 %v1671, %v1663
    %v1984 = vpack.c.b16 %v1672, %v1664
    %v1985 = vpack.c.b16 %v1673, %v1665
    %v1986 = vpack.c.b16 %v1682, %v1674
    %v1987 = vpack.c.b16 %v1683, %v1675
    %v1988 = vpack.c.b16 %v1684, %v1676
    %v1989 = vpack.c.b16 %v1685, %v1677
    %v1990 = vpack.c.b16 %v1686, %v1678
    %v1991 = vpack.c.b16 %v1687, %v1679
    %v1992 = vpack.c.b16 %v1688, %v1680
    %v1993 = vpack.c.b16 %v1689, %v1681
    %v1994 = vpack.c.b16 %v1698, %v1690
    %v1995 = vpack.c.b16 %v1699, %v1691
    %v1996 = vpack.c.b16 %v1700, %v1692
    %v1997 = vpack.c.b16 %v1701, %v1693
    %v1998 = vpack.c.b16 %v1702, %v1694
    %v1999 = vpack.c.b16 %v1703, %v1695
    %v2000 = vpack.c.b16 %v1704, %v1696
    %v2001 = vpack.c.b16 %v1705, %v1697
    %v2002 = vpack.c.b16 %v1714, %v1706
    %v2003 = vpack.c.b16 %v1715, %v1707
    %v2004 = vpack.c.b16 %v1716, %v1708
    %v2005 = vpack.c.b16 %v1717, %v1709
    %v2006 = vpack.c.b16 %v1718, %v1710
    %v2007 = vpack.c.b16 %v1719, %v1711
    %v2008 = vpack.c.b16 %v1720, %v1712
    %v2009 = vpack.c.b16 %v1721, %v1713
    %v2010 = vpack.c.b16 %v1730, %v1722
    %v2011 = vpack.c.b16 %v1731, %v1723
    %v2012 = vpack.c.b16 %v1732, %v1724
    %v2013 = vpack.c.b16 %v1733, %v1725
    %v2014 = vpack.c.b16 %v1734, %v1726
    %v2015 = vpack.c.b16 %v1735, %v1727
    %v2016 = vpack.c.b16 %v1736, %v1728
    %v2017 = vpack.c.b16 %v1737, %v1729
    %v2018 = vpack.c.b16 %v1746, %v1738
    %v2019 = vpack.c.b16 %v1747, %v1739
    %v2020 = vpack.c.b16 %v1748, %v1740
    %v2021 = vpack.c.b16 %v1749, %v1741
    %v2022 = vpack.c.b16 %v1750, %v1742
    %v2023 = vpack.c.b16 %v1751, %v1743
    %v2024 = vpack.c.b16 %v1752, %v1744
    %v2025 = vpack.c.b16 %v1753, %v1745
    %v2026 = vpack.c.b16 %v1762, %v1754
    %v2027 = vpack.c.b16 %v1763, %v1755
    %v2028 = vpack.c.b16 %v1764, %v1756
    %v2029 = vpack.c.b16 %v1765, %v1757
    %v2030 = vpack.c.b16 %v1766, %v1758
    %v2031 = vpack.c.b16 %v1767, %v1759
    %v2032 = vpack.c.b16 %v1768, %v1760
    %v2033 = vpack.c.b16 %v1769, %v1761
    %v2034 = vpack.c.b16 %v1778, %v1770
    %v2035 = vpack.c.b16 %v1779, %v1771
    %v2036 = vpack.c.b16 %v1780, %v1772
    %v2037 = vpack.c.b16 %v1781, %v1773
    %v2038 = vpack.c.b16 %v1782, %v1774
    %v2039 = vpack.c.b16 %v1783, %v1775
    %v2040 = vpack.c.b16 %v1784, %v1776
    %v2041 = vpack.c.b16 %v1785, %v1777
    %2298 = vmatprep.subr.bf16.mxu0 %v1787
    %2299 = vmatpush1.bf16.msra.mxu0 %v1786
    %2300 = vmatprep.subr.bf16.mxu0 %v1795
    %2301 = vmatpush1.bf16.msra.mxu0 %v1794
    %2302 = vmatprep.subr.bf16.mxu0 %v1803
    %2303 = vmatpush1.bf16.msra.mxu0 %v1802
    %2304 = vmatprep.subr.bf16.mxu0 %v1811
    %2305 = vmatpush1.bf16.msra.mxu0 %v1810
    %2306 = vmatprep.subr.bf16.mxu0 %v1819
    %2307 = vmatpush1.bf16.msra.mxu0 %v1818
    %2308 = vmatprep.subr.bf16.mxu0 %v1827
    %2309 = vmatpush1.bf16.msra.mxu0 %v1826
    %2310 = vmatprep.subr.bf16.mxu0 %v1835
    %2311 = vmatpush1.bf16.msra.mxu0 %v1834
    %2312 = vmatprep.subr.bf16.mxu0 %v1843
    %2313 = vmatpush1.bf16.msra.mxu0 %v1842
    %2314 = vmatprep.subr.bf16.mxu0 %v1851
    %2315 = vmatpush1.bf16.msra.mxu0 %v1850
    %2316 = vmatprep.subr.bf16.mxu0 %v1859
    %2317 = vmatpush1.bf16.msra.mxu0 %v1858
    %2318 = vmatprep.subr.bf16.mxu0 %v1867
    %2319 = vmatpush1.bf16.msra.mxu0 %v1866
    %2320 = vmatprep.subr.bf16.mxu0 %v1875
    %2321 = vmatpush1.bf16.msra.mxu0 %v1874
    %2322 = vmatprep.subr.bf16.mxu0 %v1883
    %2323 = vmatpush1.bf16.msra.mxu0 %v1882
    %2324 = vmatprep.subr.bf16.mxu0 %v1891
    %2325 = vmatpush1.bf16.msra.mxu0 %v1890
    %2326 = vmatprep.subr.bf16.mxu0 %v1899
    %2327 = vmatpush1.bf16.msra.mxu0 %v1898
    %2328 = vmatprep.subr.bf16.mxu0 %v1907
    %2329 = vmatpush1.bf16.msra.mxu0 %v1906
    %2330 = vmatprep.mubr.bf16.mxu0 %v717
    %2331 = vmatmul.mubr.bf16.gmra.mrb[0].mxu0 %v716
    %v2332 = vpop.f32.mrb[0].mxu0
    %v2333 = vadd.f32 %v981, %v2332
    %v2334 = vpop.f32.mrb[0].mxu0
    %v2335 = vadd.f32 %v985, %v2334
    %v2336 = vpop.f32.mrb[0].mxu0
    %v2337 = vadd.f32 %v981, %v2336
    %v2338 = vpop.f32.mrb[0].mxu0
    %v2339 = vadd.f32 %v985, %v2338
    %2340 = vdwg.mxu0
    %2341 = vmatprep.subr.bf16.mxu0 %v1915
    %2342 = vmatpush1.bf16.msra.mxu0 %v1914
    %2343 = vmatprep.subr.bf16.mxu0 %v1923
    %2344 = vmatpush1.bf16.msra.mxu0 %v1922
    %2345 = vmatprep.subr.bf16.mxu0 %v1931
    %2346 = vmatpush1.bf16.msra.mxu0 %v1930
    %2347 = vmatprep.subr.bf16.mxu0 %v1939
    %2348 = vmatpush1.bf16.msra.mxu0 %v1938
    %2349 = vmatprep.subr.bf16.mxu0 %v1947
    %2350 = vmatpush1.bf16.msra.mxu0 %v1946
    %2351 = vmatprep.subr.bf16.mxu0 %v1955
    %2352 = vmatpush1.bf16.msra.mxu0 %v1954
    %2353 = vmatprep.subr.bf16.mxu0 %v1963
    %2354 = vmatpush1.bf16.msra.mxu0 %v1962
    %2355 = vmatprep.subr.bf16.mxu0 %v1971
    %2356 = vmatpush1.bf16.msra.mxu0 %v1970
    %2357 = vmatprep.subr.bf16.mxu0 %v1979
    %2358 = vmatpush1.bf16.msra.mxu0 %v1978
    %2359 = vmatprep.subr.bf16.mxu0 %v1987
    %2360 = vmatpush1.bf16.msra.mxu0 %v1986
    %2361 = vmatprep.subr.bf16.mxu0 %v1995
    %2362 = vmatpush1.bf16.msra.mxu0 %v1994
    %2363 = vmatprep.subr.bf16.mxu0 %v2003
    %2364 = vmatpush1.bf16.msra.mxu0 %v2002
    %2365 = vmatprep.subr.bf16.mxu0 %v2011
    %2366 = vmatpush1.bf16.msra.mxu0 %v2010
    %2367 = vmatprep.subr.bf16.mxu0 %v2019
    %2368 = vmatpush1.bf16.msra.mxu0 %v2018
    %2369 = vmatprep.subr.bf16.mxu0 %v2027
    %2370 = vmatpush1.bf16.msra.mxu0 %v2026
    %2371 = vmatprep.subr.bf16.mxu0 %v2035
    %2372 = vmatpush1.bf16.msra.mxu0 %v2034
    %2373 = vmatprep.mubr.bf16.mxu0 %v719
    %2374 = vmatmul.mubr.bf16.gmra.mrb[0].mxu0 %v718
    %v2375 = vpop.f32.mrb[0].mxu0
    %v2376 = vadd.f32 %v2333, %v2375
    %v2377 = vpop.f32.mrb[0].mxu0
    %v2378 = vadd.f32 %v2335, %v2377
    %v2379 = vpop.f32.mrb[0].mxu0
    %v2380 = vadd.f32 %v2337, %v2379
    %v2381 = vpop.f32.mrb[0].mxu0
    %v2382 = vadd.f32 %v2339, %v2381
    %2383 = vdwg.mxu0
    %2384 = vmatprep.subr.bf16.mxu0 %v1789
    %2385 = vmatpush1.bf16.msra.mxu0 %v1788
    %2386 = vmatprep.subr.bf16.mxu0 %v1797
    %2387 = vmatpush1.bf16.msra.mxu0 %v1796
    %2388 = vmatprep.subr.bf16.mxu0 %v1805
    %2389 = vmatpush1.bf16.msra.mxu0 %v1804
    %2390 = vmatprep.subr.bf16.mxu0 %v1813
    %2391 = vmatpush1.bf16.msra.mxu0 %v1812
    %2392 = vmatprep.subr.bf16.mxu0 %v1821
    %2393 = vmatpush1.bf16.msra.mxu0 %v1820
    %2394 = vmatprep.subr.bf16.mxu0 %v1829
    %2395 = vmatpush1.bf16.msra.mxu0 %v1828
    %2396 = vmatprep.subr.bf16.mxu0 %v1837
    %2397 = vmatpush1.bf16.msra.mxu0 %v1836
    %2398 = vmatprep.subr.bf16.mxu0 %v1845
    %2399 = vmatpush1.bf16.msra.mxu0 %v1844
    %2400 = vmatprep.subr.bf16.mxu0 %v1853
    %2401 = vmatpush1.bf16.msra.mxu0 %v1852
    %2402 = vmatprep.subr.bf16.mxu0 %v1861
    %2403 = vmatpush1.bf16.msra.mxu0 %v1860
    %2404 = vmatprep.subr.bf16.mxu0 %v1869
    %2405 = vmatpush1.bf16.msra.mxu0 %v1868
    %2406 = vmatprep.subr.bf16.mxu0 %v1877
    %2407 = vmatpush1.bf16.msra.mxu0 %v1876
    %2408 = vmatprep.subr.bf16.mxu0 %v1885
    %2409 = vmatpush1.bf16.msra.mxu0 %v1884
    %2410 = vmatprep.subr.bf16.mxu0 %v1893
    %2411 = vmatpush1.bf16.msra.mxu0 %v1892
    %2412 = vmatprep.subr.bf16.mxu0 %v1901
    %2413 = vmatpush1.bf16.msra.mxu0 %v1900
    %2414 = vmatprep.subr.bf16.mxu0 %v1909
    %2415 = vmatpush1.bf16.msra.mxu0 %v1908
    %2416 = vmatprep.mubr.bf16.mxu0 %v717
    %2417 = vmatmul.mubr.bf16.gmra.mrb[0].mxu0 %v716
    %v2418 = vpop.f32.mrb[0].mxu0
    %v2419 = vadd.f32 %v989, %v2418
    %v2420 = vpop.f32.mrb[0].mxu0
    %v2421 = vadd.f32 %v993, %v2420
    %v2422 = vpop.f32.mrb[0].mxu0
    %v2423 = vadd.f32 %v989, %v2422
    %v2424 = vpop.f32.mrb[0].mxu0
    %v2425 = vadd.f32 %v993, %v2424
    %2426 = vdwg.mxu0
    %2427 = vmatprep.subr.bf16.mxu0 %v1917
    %2428 = vmatpush1.bf16.msra.mxu0 %v1916
    %2429 = vmatprep.subr.bf16.mxu0 %v1925
    %2430 = vmatpush1.bf16.msra.mxu0 %v1924
    %2431 = vmatprep.subr.bf16.mxu0 %v1933
    %2432 = vmatpush1.bf16.msra.mxu0 %v1932
    %2433 = vmatprep.subr.bf16.mxu0 %v1941
    %2434 = vmatpush1.bf16.msra.mxu0 %v1940
    %2435 = vmatprep.subr.bf16.mxu0 %v1949
    %2436 = vmatpush1.bf16.msra.mxu0 %v1948
    %2437 = vmatprep.subr.bf16.mxu0 %v1957
    %2438 = vmatpush1.bf16.msra.mxu0 %v1956
    %2439 = vmatprep.subr.bf16.mxu0 %v1965
    %2440 = vmatpush1.bf16.msra.mxu0 %v1964
    %2441 = vmatprep.subr.bf16.mxu0 %v1973
    %2442 = vmatpush1.bf16.msra.mxu0 %v1972
    %2443 = vmatprep.subr.bf16.mxu0 %v1981
    %2444 = vmatpush1.bf16.msra.mxu0 %v1980
    %2445 = vmatprep.subr.bf16.mxu0 %v1989
    %2446 = vmatpush1.bf16.msra.mxu0 %v1988
    %2447 = vmatprep.subr.bf16.mxu0 %v1997
    %2448 = vmatpush1.bf16.msra.mxu0 %v1996
    %2449 = vmatprep.subr.bf16.mxu0 %v2005
    %2450 = vmatpush1.bf16.msra.mxu0 %v2004
    %2451 = vmatprep.subr.bf16.mxu0 %v2013
    %2452 = vmatpush1.bf16.msra.mxu0 %v2012
    %2453 = vmatprep.subr.bf16.mxu0 %v2021
    %2454 = vmatpush1.bf16.msra.mxu0 %v2020
    %2455 = vmatprep.subr.bf16.mxu0 %v2029
    %2456 = vmatpush1.bf16.msra.mxu0 %v2028
    %2457 = vmatprep.subr.bf16.mxu0 %v2037
    %2458 = vmatpush1.bf16.msra.mxu0 %v2036
    %2459 = vmatprep.mubr.bf16.mxu0 %v719
    %2460 = vmatmul.mubr.bf16.gmra.mrb[0].mxu0 %v718
    %v2461 = vpop.f32.mrb[0].mxu0
    %v2462 = vadd.f32 %v2419, %v2461
    %v2463 = vpop.f32.mrb[0].mxu0
    %v2464 = vadd.f32 %v2421, %v2463
    %v2465 = vpop.f32.mrb[0].mxu0
    %v2466 = vadd.f32 %v2423, %v2465
    %v2467 = vpop.f32.mrb[0].mxu0
    %v2468 = vadd.f32 %v2425, %v2467
    %2469 = vdwg.mxu0
    %2470 = vmatprep.subr.bf16.mxu0 %v1791
    %2471 = vmatpush1.bf16.msra.mxu0 %v1790
    %2472 = vmatprep.subr.bf16.mxu0 %v1799
    %2473 = vmatpush1.bf16.msra.mxu0 %v1798
    %2474 = vmatprep.subr.bf16.mxu0 %v1807
    %2475 = vmatpush1.bf16.msra.mxu0 %v1806
    %2476 = vmatprep.subr.bf16.mxu0 %v1815
    %2477 = vmatpush1.bf16.msra.mxu0 %v1814
    %2478 = vmatprep.subr.bf16.mxu0 %v1823
    %2479 = vmatpush1.bf16.msra.mxu0 %v1822
    %2480 = vmatprep.subr.bf16.mxu0 %v1831
    %2481 = vmatpush1.bf16.msra.mxu0 %v1830
    %2482 = vmatprep.subr.bf16.mxu0 %v1839
    %2483 = vmatpush1.bf16.msra.mxu0 %v1838
    %2484 = vmatprep.subr.bf16.mxu0 %v1847
    %2485 = vmatpush1.bf16.msra.mxu0 %v1846
    %2486 = vmatprep.subr.bf16.mxu0 %v1855
    %2487 = vmatpush1.bf16.msra.mxu0 %v1854
    %2488 = vmatprep.subr.bf16.mxu0 %v1863
    %2489 = vmatpush1.bf16.msra.mxu0 %v1862
    %2490 = vmatprep.subr.bf16.mxu0 %v1871
    %2491 = vmatpush1.bf16.msra.mxu0 %v1870
    %2492 = vmatprep.subr.bf16.mxu0 %v1879
    %2493 = vmatpush1.bf16.msra.mxu0 %v1878
    %2494 = vmatprep.subr.bf16.mxu0 %v1887
    %2495 = vmatpush1.bf16.msra.mxu0 %v1886
    %2496 = vmatprep.subr.bf16.mxu0 %v1895
    %2497 = vmatpush1.bf16.msra.mxu0 %v1894
    %2498 = vmatprep.subr.bf16.mxu0 %v1903
    %2499 = vmatpush1.bf16.msra.mxu0 %v1902
    %2500 = vmatprep.subr.bf16.mxu0 %v1911
    %2501 = vmatpush1.bf16.msra.mxu0 %v1910
    %2502 = vmatprep.mubr.bf16.mxu0 %v717
    %2503 = vmatmul.mubr.bf16.gmra.mrb[0].mxu0 %v716
    %v2504 = vpop.f32.mrb[0].mxu0
    %v2505 = vadd.f32 %v997, %v2504
    %v2506 = vpop.f32.mrb[0].mxu0
    %v2507 = vadd.f32 %v1001, %v2506
    %v2508 = vpop.f32.mrb[0].mxu0
    %v2509 = vadd.f32 %v997, %v2508
    %v2510 = vpop.f32.mrb[0].mxu0
    %v2511 = vadd.f32 %v1001, %v2510
    %2512 = vdwg.mxu0
    %2513 = vmatprep.subr.bf16.mxu0 %v1919
    %2514 = vmatpush1.bf16.msra.mxu0 %v1918
    %2515 = vmatprep.subr.bf16.mxu0 %v1927
    %2516 = vmatpush1.bf16.msra.mxu0 %v1926
    %2517 = vmatprep.subr.bf16.mxu0 %v1935
    %2518 = vmatpush1.bf16.msra.mxu0 %v1934
    %2519 = vmatprep.subr.bf16.mxu0 %v1943
    %2520 = vmatpush1.bf16.msra.mxu0 %v1942
    %2521 = vmatprep.subr.bf16.mxu0 %v1951
    %2522 = vmatpush1.bf16.msra.mxu0 %v1950
    %2523 = vmatprep.subr.bf16.mxu0 %v1959
    %2524 = vmatpush1.bf16.msra.mxu0 %v1958
    %2525 = vmatprep.subr.bf16.mxu0 %v1967
    %2526 = vmatpush1.bf16.msra.mxu0 %v1966
    %2527 = vmatprep.subr.bf16.mxu0 %v1975
    %2528 = vmatpush1.bf16.msra.mxu0 %v1974
    %2529 = vmatprep.subr.bf16.mxu0 %v1983
    %2530 = vmatpush1.bf16.msra.mxu0 %v1982
    %2531 = vmatprep.subr.bf16.mxu0 %v1991
    %2532 = vmatpush1.bf16.msra.mxu0 %v1990
    %2533 = vmatprep.subr.bf16.mxu0 %v1999
    %2534 = vmatpush1.bf16.msra.mxu0 %v1998
    %2535 = vmatprep.subr.bf16.mxu0 %v2007
    %2536 = vmatpush1.bf16.msra.mxu0 %v2006
    %2537 = vmatprep.subr.bf16.mxu0 %v2015
    %2538 = vmatpush1.bf16.msra.mxu0 %v2014
    %2539 = vmatprep.subr.bf16.mxu0 %v2023
    %2540 = vmatpush1.bf16.msra.mxu0 %v2022
    %2541 = vmatprep.subr.bf16.mxu0 %v2031
    %2542 = vmatpush1.bf16.msra.mxu0 %v2030
    %2543 = vmatprep.subr.bf16.mxu0 %v2039
    %2544 = vmatpush1.bf16.msra.mxu0 %v2038
    %2545 = vmatprep.mubr.bf16.mxu0 %v719
    %2546 = vmatmul.mubr.bf16.gmra.mrb[0].mxu0 %v718
    %v2547 = vpop.f32.mrb[0].mxu0
    %v2548 = vadd.f32 %v2505, %v2547
    %v2549 = vpop.f32.mrb[0].mxu0
    %v2550 = vadd.f32 %v2507, %v2549
    %v2551 = vpop.f32.mrb[0].mxu0
    %v2552 = vadd.f32 %v2509, %v2551
    %v2553 = vpop.f32.mrb[0].mxu0
    %v2554 = vadd.f32 %v2511, %v2553
    %2555 = vdwg.mxu0
    %2556 = vmatprep.subr.bf16.mxu0 %v1793
    %2557 = vmatpush1.bf16.msra.mxu0 %v1792
    %2558 = vmatprep.subr.bf16.mxu0 %v1801
    %2559 = vmatpush1.bf16.msra.mxu0 %v1800
    %2560 = vmatprep.subr.bf16.mxu0 %v1809
    %2561 = vmatpush1.bf16.msra.mxu0 %v1808
    %2562 = vmatprep.subr.bf16.mxu0 %v1817
    %2563 = vmatpush1.bf16.msra.mxu0 %v1816
    %2564 = vmatprep.subr.bf16.mxu0 %v1825
    %2565 = vmatpush1.bf16.msra.mxu0 %v1824
    %2566 = vmatprep.subr.bf16.mxu0 %v1833
    %2567 = vmatpush1.bf16.msra.mxu0 %v1832
    %2568 = vmatprep.subr.bf16.mxu0 %v1841
    %2569 = vmatpush1.bf16.msra.mxu0 %v1840
    %2570 = vmatprep.subr.bf16.mxu0 %v1849
    %2571 = vmatpush1.bf16.msra.mxu0 %v1848
    %2572 = vmatprep.subr.bf16.mxu0 %v1857
    %2573 = vmatpush1.bf16.msra.mxu0 %v1856
    %2574 = vmatprep.subr.bf16.mxu0 %v1865
    %2575 = vmatpush1.bf16.msra.mxu0 %v1864
    %2576 = vmatprep.subr.bf16.mxu0 %v1873
    %2577 = vmatpush1.bf16.msra.mxu0 %v1872
    %2578 = vmatprep.subr.bf16.mxu0 %v1881
    %2579 = vmatpush1.bf16.msra.mxu0 %v1880
    %2580 = vmatprep.subr.bf16.mxu0 %v1889
    %2581 = vmatpush1.bf16.msra.mxu0 %v1888
    %2582 = vmatprep.subr.bf16.mxu0 %v1897
    %2583 = vmatpush1.bf16.msra.mxu0 %v1896
    %2584 = vmatprep.subr.bf16.mxu0 %v1905
    %2585 = vmatpush1.bf16.msra.mxu0 %v1904
    %2586 = vmatprep.subr.bf16.mxu0 %v1913
    %2587 = vmatpush1.bf16.msra.mxu0 %v1912
    %2588 = vmatprep.mubr.bf16.mxu0 %v717
    %2589 = vmatmul.mubr.bf16.gmra.mrb[0].mxu0 %v716
    %v2590 = vpop.f32.mrb[0].mxu0
    %v2591 = vadd.f32 %v1005, %v2590
    %v2592 = vpop.f32.mrb[0].mxu0
    %v2593 = vadd.f32 %v1009, %v2592
    %v2594 = vpop.f32.mrb[0].mxu0
    %v2595 = vadd.f32 %v1005, %v2594
    %v2596 = vpop.f32.mrb[0].mxu0
    %v2597 = vadd.f32 %v1009, %v2596
    %2598 = vdwg.mxu0
    %2599 = vmatprep.subr.bf16.mxu0 %v1921
    %2600 = vmatpush1.bf16.msra.mxu0 %v1920
    %2601 = vmatprep.subr.bf16.mxu0 %v1929
    %2602 = vmatpush1.bf16.msra.mxu0 %v1928
    %2603 = vmatprep.subr.bf16.mxu0 %v1937
    %2604 = vmatpush1.bf16.msra.mxu0 %v1936
    %2605 = vmatprep.subr.bf16.mxu0 %v1945
    %2606 = vmatpush1.bf16.msra.mxu0 %v1944
    %2607 = vmatprep.subr.bf16.mxu0 %v1953
    %2608 = vmatpush1.bf16.msra.mxu0 %v1952
    %2609 = vmatprep.subr.bf16.mxu0 %v1961
    %2610 = vmatpush1.bf16.msra.mxu0 %v1960
    %2611 = vmatprep.subr.bf16.mxu0 %v1969
    %2612 = vmatpush1.bf16.msra.mxu0 %v1968
    %2613 = vmatprep.subr.bf16.mxu0 %v1977
    %2614 = vmatpush1.bf16.msra.mxu0 %v1976
    %2615 = vmatprep.subr.bf16.mxu0 %v1985
    %2616 = vmatpush1.bf16.msra.mxu0 %v1984
    %2617 = vmatprep.subr.bf16.mxu0 %v1993
    %2618 = vmatpush1.bf16.msra.mxu0 %v1992
    %2619 = vmatprep.subr.bf16.mxu0 %v2001
    %2620 = vmatpush1.bf16.msra.mxu0 %v2000
    %2621 = vmatprep.subr.bf16.mxu0 %v2009
    %2622 = vmatpush1.bf16.msra.mxu0 %v2008
    %2623 = vmatprep.subr.bf16.mxu0 %v2017
    %2624 = vmatpush1.bf16.msra.mxu0 %v2016
    %2625 = vmatprep.subr.bf16.mxu0 %v2025
    %2626 = vmatpush1.bf16.msra.mxu0 %v2024
    %2627 = vmatprep.subr.bf16.mxu0 %v2033
    %2628 = vmatpush1.bf16.msra.mxu0 %v2032
    %2629 = vmatprep.subr.bf16.mxu0 %v2041
    %2630 = vmatpush1.bf16.msra.mxu0 %v2040
    %2631 = vmatprep.mubr.bf16.mxu0 %v719
    %2632 = vmatmul.mubr.bf16.gmra.mrb[0].mxu0 %v718
    %v2633 = vpop.f32.mrb[0].mxu0
    %v2634 = vadd.f32 %v2591, %v2633
    %v2635 = vpop.f32.mrb[0].mxu0
    %v2636 = vadd.f32 %v2593, %v2635
    %v2637 = vpop.f32.mrb[0].mxu0
    %v2638 = vadd.f32 %v2595, %v2637
    %v2639 = vpop.f32.mrb[0].mxu0
    %v2640 = vadd.f32 %v2597, %v2639
    %2641 = vdwg.mxu0
    %v2642 = vpack.c.bf16 %v2380, %v2376
    %v2643 = vpack.c.bf16 %v2382, %v2378
    %v2644 = vpack.c.bf16 %v2466, %v2462
    %v2645 = vpack.c.bf16 %v2468, %v2464
    %v2646 = vpack.c.bf16 %v2552, %v2548
    %v2647 = vpack.c.bf16 %v2554, %v2550
    %v2648 = vpack.c.bf16 %v2638, %v2634
    %v2649 = vpack.c.bf16 %v2640, %v2636
    %v2650 = vmax.bf16 %v2642, 0
    %v2651 = vmax.bf16 %v2643, 0
    %v2652 = vmax.bf16 %v2644, 0
    %v2653 = vmax.bf16 %v2645, 0
    %v2654 = vmax.bf16 %v2646, 0
    %v2655 = vmax.bf16 %v2647, 0
    %v2656 = vmax.bf16 %v2648, 0
    %v2657 = vmax.bf16 %v2649, 0
    %v2658 = vld [vmem:[#allocation10] sm:$0xf]
    %v2659 = vld [vmem:[#allocation10 + $0x4] sm:$0xf]
    %v2660 = vld [vmem:[#allocation10 + $0x8] sm:$0xf]
    %v2661 = vld [vmem:[#allocation10 + $0xc] sm:$0xf]
    %v2662 = vld [vmem:[#allocation10 + $0x10] sm:$0xf]
    %v2663 = vld [vmem:[#allocation10 + $0x14] sm:$0xf]
    %v2664 = vld [vmem:[#allocation10 + $0x18] sm:$0xf]
    %v2665 = vld [vmem:[#allocation10 + $0x1c] sm:$0xf]
    %v2666 = vld [vmem:[#allocation10 + $0x20] sm:$0xf]
    %v2667 = vld [vmem:[#allocation10 + $0x24] sm:$0xf]
    %v2668 = vld [vmem:[#allocation10 + $0x28] sm:$0xf]
    %v2669 = vld [vmem:[#allocation10 + $0x2c] sm:$0xf]
    %v2670 = vld [vmem:[#allocation10 + $0x30] sm:$0xf]
    %v2671 = vld [vmem:[#allocation10 + $0x34] sm:$0xf]
    %v2672 = vld [vmem:[#allocation10 + $0x38] sm:$0xf]
    %v2673 = vld [vmem:[#allocation10 + $0x3c] sm:$0xf]
    %v2674 = vld [vmem:[#allocation10 + $0x40] sm:$0xf]
    %v2675 = vld [vmem:[#allocation10 + $0x44] sm:$0xf]
    %v2676 = vld [vmem:[#allocation10 + $0x48] sm:$0xf]
    %v2677 = vld [vmem:[#allocation10 + $0x4c] sm:$0xf]
    %v2678 = vld [vmem:[#allocation10 + $0x50] sm:$0xf]
    %v2679 = vld [vmem:[#allocation10 + $0x54] sm:$0xf]
    %v2680 = vld [vmem:[#allocation10 + $0x58] sm:$0xf]
    %v2681 = vld [vmem:[#allocation10 + $0x5c] sm:$0xf]
    %v2682 = vld [vmem:[#allocation10 + $0x60] sm:$0xf]
    %v2683 = vld [vmem:[#allocation10 + $0x64] sm:$0xf]
    %v2684 = vld [vmem:[#allocation10 + $0x68] sm:$0xf]
    %v2685 = vld [vmem:[#allocation10 + $0x6c] sm:$0xf]
    %v2686 = vld [vmem:[#allocation10 + $0x70] sm:$0xf]
    %v2687 = vld [vmem:[#allocation10 + $0x74] sm:$0xf]
    %v2688 = vld [vmem:[#allocation10 + $0x78] sm:$0xf]
    %v2689 = vld [vmem:[#allocation10 + $0x7c] sm:$0xf]
    %v2690 = vld [vmem:[#allocation10 + $0x80] sm:$0xf]
    %v2691 = vld [vmem:[#allocation10 + $0x84] sm:$0xf]
    %v2692 = vld [vmem:[#allocation10 + $0x88] sm:$0xf]
    %v2693 = vld [vmem:[#allocation10 + $0x8c] sm:$0xf]
    %v2694 = vld [vmem:[#allocation10 + $0x90] sm:$0xf]
    %v2695 = vld [vmem:[#allocation10 + $0x94] sm:$0xf]
    %v2696 = vld [vmem:[#allocation10 + $0x98] sm:$0xf]
    %v2697 = vld [vmem:[#allocation10 + $0x9c] sm:$0xf]
    %v2698 = vld [vmem:[#allocation10 + $0xa0] sm:$0xf]
    %v2699 = vld [vmem:[#allocation10 + $0xa4] sm:$0xf]
    %v2700 = vld [vmem:[#allocation10 + $0xa8] sm:$0xf]
    %v2701 = vld [vmem:[#allocation10 + $0xac] sm:$0xf]
    %v2702 = vld [vmem:[#allocation10 + $0xb0] sm:$0xf]
    %v2703 = vld [vmem:[#allocation10 + $0xb4] sm:$0xf]
    %v2704 = vld [vmem:[#allocation10 + $0xb8] sm:$0xf]
    %v2705 = vld [vmem:[#allocation10 + $0xbc] sm:$0xf]
    %v2706 = vld [vmem:[#allocation10 + $0xc0] sm:$0xf]
    %v2707 = vld [vmem:[#allocation10 + $0xc4] sm:$0xf]
    %v2708 = vld [vmem:[#allocation10 + $0xc8] sm:$0xf]
    %v2709 = vld [vmem:[#allocation10 + $0xcc] sm:$0xf]
    %v2710 = vld [vmem:[#allocation10 + $0xd0] sm:$0xf]
    %v2711 = vld [vmem:[#allocation10 + $0xd4] sm:$0xf]
    %v2712 = vld [vmem:[#allocation10 + $0xd8] sm:$0xf]
    %v2713 = vld [vmem:[#allocation10 + $0xdc] sm:$0xf]
    %v2714 = vld [vmem:[#allocation10 + $0xe0] sm:$0xf]
    %v2715 = vld [vmem:[#allocation10 + $0xe4] sm:$0xf]
    %v2716 = vld [vmem:[#allocation10 + $0xe8] sm:$0xf]
    %v2717 = vld [vmem:[#allocation10 + $0xec] sm:$0xf]
    %v2718 = vld [vmem:[#allocation10 + $0xf0] sm:$0xf]
    %v2719 = vld [vmem:[#allocation10 + $0xf4] sm:$0xf]
    %v2720 = vld [vmem:[#allocation10 + $0xf8] sm:$0xf]
    %v2721 = vld [vmem:[#allocation10 + $0xfc] sm:$0xf]
    %v2722 = vld [vmem:[#allocation10 + $0x100] sm:$0xf]
    %v2723 = vld [vmem:[#allocation10 + $0x104] sm:$0xf]
    %v2724 = vld [vmem:[#allocation10 + $0x108] sm:$0xf]
    %v2725 = vld [vmem:[#allocation10 + $0x10c] sm:$0xf]
    %v2726 = vld [vmem:[#allocation10 + $0x110] sm:$0xf]
    %v2727 = vld [vmem:[#allocation10 + $0x114] sm:$0xf]
    %v2728 = vld [vmem:[#allocation10 + $0x118] sm:$0xf]
    %v2729 = vld [vmem:[#allocation10 + $0x11c] sm:$0xf]
    %v2730 = vld [vmem:[#allocation10 + $0x120] sm:$0xf]
    %v2731 = vld [vmem:[#allocation10 + $0x124] sm:$0xf]
    %v2732 = vld [vmem:[#allocation10 + $0x128] sm:$0xf]
    %v2733 = vld [vmem:[#allocation10 + $0x12c] sm:$0xf]
    %v2734 = vld [vmem:[#allocation10 + $0x130] sm:$0xf]
    %v2735 = vld [vmem:[#allocation10 + $0x134] sm:$0xf]
    %v2736 = vld [vmem:[#allocation10 + $0x138] sm:$0xf]
    %v2737 = vld [vmem:[#allocation10 + $0x13c] sm:$0xf]
    %v2738 = vld [vmem:[#allocation10 + $0x140] sm:$0xf]
    %v2739 = vld [vmem:[#allocation10 + $0x144] sm:$0xf]
    %v2740 = vld [vmem:[#allocation10 + $0x148] sm:$0xf]
    %v2741 = vld [vmem:[#allocation10 + $0x14c] sm:$0xf]
    %v2742 = vld [vmem:[#allocation10 + $0x150] sm:$0xf]
    %v2743 = vld [vmem:[#allocation10 + $0x154] sm:$0xf]
    %v2744 = vld [vmem:[#allocation10 + $0x158] sm:$0xf]
    %v2745 = vld [vmem:[#allocation10 + $0x15c] sm:$0xf]
    %v2746 = vld [vmem:[#allocation10 + $0x160] sm:$0xf]
    %v2747 = vld [vmem:[#allocation10 + $0x164] sm:$0xf]
    %v2748 = vld [vmem:[#allocation10 + $0x168] sm:$0xf]
    %v2749 = vld [vmem:[#allocation10 + $0x16c] sm:$0xf]
    %v2750 = vld [vmem:[#allocation10 + $0x170] sm:$0xf]
    %v2751 = vld [vmem:[#allocation10 + $0x174] sm:$0xf]
    %v2752 = vld [vmem:[#allocation10 + $0x178] sm:$0xf]
    %v2753 = vld [vmem:[#allocation10 + $0x17c] sm:$0xf]
    %v2754 = vld [vmem:[#allocation10 + $0x180] sm:$0xf]
    %v2755 = vld [vmem:[#allocation10 + $0x184] sm:$0xf]
    %v2756 = vld [vmem:[#allocation10 + $0x188] sm:$0xf]
    %v2757 = vld [vmem:[#allocation10 + $0x18c] sm:$0xf]
    %v2758 = vld [vmem:[#allocation10 + $0x190] sm:$0xf]
    %v2759 = vld [vmem:[#allocation10 + $0x194] sm:$0xf]
    %v2760 = vld [vmem:[#allocation10 + $0x198] sm:$0xf]
    %v2761 = vld [vmem:[#allocation10 + $0x19c] sm:$0xf]
    %v2762 = vld [vmem:[#allocation10 + $0x1a0] sm:$0xf]
    %v2763 = vld [vmem:[#allocation10 + $0x1a4] sm:$0xf]
    %v2764 = vld [vmem:[#allocation10 + $0x1a8] sm:$0xf]
    %v2765 = vld [vmem:[#allocation10 + $0x1ac] sm:$0xf]
    %v2766 = vld [vmem:[#allocation10 + $0x1b0] sm:$0xf]
    %v2767 = vld [vmem:[#allocation10 + $0x1b4] sm:$0xf]
    %v2768 = vld [vmem:[#allocation10 + $0x1b8] sm:$0xf]
    %v2769 = vld [vmem:[#allocation10 + $0x1bc] sm:$0xf]
    %v2770 = vld [vmem:[#allocation10 + $0x1c0] sm:$0xf]
    %v2771 = vld [vmem:[#allocation10 + $0x1c4] sm:$0xf]
    %v2772 = vld [vmem:[#allocation10 + $0x1c8] sm:$0xf]
    %v2773 = vld [vmem:[#allocation10 + $0x1cc] sm:$0xf]
    %v2774 = vld [vmem:[#allocation10 + $0x1d0] sm:$0xf]
    %v2775 = vld [vmem:[#allocation10 + $0x1d4] sm:$0xf]
    %v2776 = vld [vmem:[#allocation10 + $0x1d8] sm:$0xf]
    %v2777 = vld [vmem:[#allocation10 + $0x1dc] sm:$0xf]
    %v2778 = vld [vmem:[#allocation10 + $0x1e0] sm:$0xf]
    %v2779 = vld [vmem:[#allocation10 + $0x1e4] sm:$0xf]
    %v2780 = vld [vmem:[#allocation10 + $0x1e8] sm:$0xf]
    %v2781 = vld [vmem:[#allocation10 + $0x1ec] sm:$0xf]
    %v2782 = vld [vmem:[#allocation10 + $0x1f0] sm:$0xf]
    %v2783 = vld [vmem:[#allocation10 + $0x1f4] sm:$0xf]
    %v2784 = vld [vmem:[#allocation10 + $0x1f8] sm:$0xf]
    %v2785 = vld [vmem:[#allocation10 + $0x1fc] sm:$0xf]
    %v2786 = vld [vmem:[%s8] sm:$0x1]
    %v2788 = vlaneseq
    %v2789 = vshrl.u32 %v2788, 7
    %v2790 = vsub.s32 0, %v2789
    %v2791 = vrot.slane %v2786, %v2790
    %v2921 = vunpack.c.l.b16 %v2658
    %v2922 = vunpack.c.l.b16 %v2659
    %v2923 = vunpack.c.l.b16 %v2660
    %v2924 = vunpack.c.l.b16 %v2661
    %v2925 = vunpack.c.l.b16 %v2662
    %v2926 = vunpack.c.l.b16 %v2663
    %v2927 = vunpack.c.l.b16 %v2664
    %v2928 = vunpack.c.l.b16 %v2665
    %v2929 = vunpack.c.l.b16 %v2666
    %v2930 = vunpack.c.l.b16 %v2667
    %v2931 = vunpack.c.l.b16 %v2668
    %v2932 = vunpack.c.l.b16 %v2669
    %v2933 = vunpack.c.l.b16 %v2670
    %v2934 = vunpack.c.l.b16 %v2671
    %v2935 = vunpack.c.l.b16 %v2672
    %v2936 = vunpack.c.l.b16 %v2673
    %v2937 = vunpack.c.l.b16 %v2674
    %v2938 = vunpack.c.l.b16 %v2675
    %v2939 = vunpack.c.l.b16 %v2676
    %v2940 = vunpack.c.l.b16 %v2677
    %v2941 = vunpack.c.l.b16 %v2678
    %v2942 = vunpack.c.l.b16 %v2679
    %v2943 = vunpack.c.l.b16 %v2680
    %v2944 = vunpack.c.l.b16 %v2681
    %v2945 = vunpack.c.l.b16 %v2682
    %v2946 = vunpack.c.l.b16 %v2683
    %v2947 = vunpack.c.l.b16 %v2684
    %v2948 = vunpack.c.l.b16 %v2685
    %v2949 = vunpack.c.l.b16 %v2686
    %v2950 = vunpack.c.l.b16 %v2687
    %v2951 = vunpack.c.l.b16 %v2688
    %v2952 = vunpack.c.l.b16 %v2689
    %v2953 = vunpack.c.l.b16 %v2690
    %v2954 = vunpack.c.l.b16 %v2691
    %v2955 = vunpack.c.l.b16 %v2692
    %v2956 = vunpack.c.l.b16 %v2693
    %v2957 = vunpack.c.l.b16 %v2694
    %v2958 = vunpack.c.l.b16 %v2695
    %v2959 = vunpack.c.l.b16 %v2696
    %v2960 = vunpack.c.l.b16 %v2697
    %v2961 = vunpack.c.l.b16 %v2698
    %v2962 = vunpack.c.l.b16 %v2699
    %v2963 = vunpack.c.l.b16 %v2700
    %v2964 = vunpack.c.l.b16 %v2701
    %v2965 = vunpack.c.l.b16 %v2702
    %v2966 = vunpack.c.l.b16 %v2703
    %v2967 = vunpack.c.l.b16 %v2704
    %v2968 = vunpack.c.l.b16 %v2705
    %v2969 = vunpack.c.l.b16 %v2706
    %v2970 = vunpack.c.l.b16 %v2707
    %v2971 = vunpack.c.l.b16 %v2708
    %v2972 = vunpack.c.l.b16 %v2709
    %v2973 = vunpack.c.l.b16 %v2710
    %v2974 = vunpack.c.l.b16 %v2711
    %v2975 = vunpack.c.l.b16 %v2712
    %v2976 = vunpack.c.l.b16 %v2713
    %v2977 = vunpack.c.l.b16 %v2714
    %v2978 = vunpack.c.l.b16 %v2715
    %v2979 = vunpack.c.l.b16 %v2716
    %v2980 = vunpack.c.l.b16 %v2717
    %v2981 = vunpack.c.l.b16 %v2718
    %v2982 = vunpack.c.l.b16 %v2719
    %v2983 = vunpack.c.l.b16 %v2720
    %v2984 = vunpack.c.l.b16 %v2721
    %v2985 = vunpack.c.l.b16 %v2722
    %v2986 = vunpack.c.l.b16 %v2723
    %v2987 = vunpack.c.l.b16 %v2724
    %v2988 = vunpack.c.l.b16 %v2725
    %v2989 = vunpack.c.l.b16 %v2726
    %v2990 = vunpack.c.l.b16 %v2727
    %v2991 = vunpack.c.l.b16 %v2728
    %v2992 = vunpack.c.l.b16 %v2729
    %v2993 = vunpack.c.l.b16 %v2730
    %v2994 = vunpack.c.l.b16 %v2731
    %v2995 = vunpack.c.l.b16 %v2732
    %v2996 = vunpack.c.l.b16 %v2733
    %v2997 = vunpack.c.l.b16 %v2734
    %v2998 = vunpack.c.l.b16 %v2735
    %v2999 = vunpack.c.l.b16 %v2736
    %v3000 = vunpack.c.l.b16 %v2737
    %v3001 = vunpack.c.l.b16 %v2738
    %v3002 = vunpack.c.l.b16 %v2739
    %v3003 = vunpack.c.l.b16 %v2740
    %v3004 = vunpack.c.l.b16 %v2741
    %v3005 = vunpack.c.l.b16 %v2742
    %v3006 = vunpack.c.l.b16 %v2743
    %v3007 = vunpack.c.l.b16 %v2744
    %v3008 = vunpack.c.l.b16 %v2745
    %v3009 = vunpack.c.l.b16 %v2746
    %v3010 = vunpack.c.l.b16 %v2747
    %v3011 = vunpack.c.l.b16 %v2748
    %v3012 = vunpack.c.l.b16 %v2749
    %v3013 = vunpack.c.l.b16 %v2750
    %v3014 = vunpack.c.l.b16 %v2751
    %v3015 = vunpack.c.l.b16 %v2752
    %v3016 = vunpack.c.l.b16 %v2753
    %v3017 = vunpack.c.l.b16 %v2754
    %v3018 = vunpack.c.l.b16 %v2755
    %v3019 = vunpack.c.l.b16 %v2756
    %v3020 = vunpack.c.l.b16 %v2757
    %v3021 = vunpack.c.l.b16 %v2758
    %v3022 = vunpack.c.l.b16 %v2759
    %v3023 = vunpack.c.l.b16 %v2760
    %v3024 = vunpack.c.l.b16 %v2761
    %v3025 = vunpack.c.l.b16 %v2762
    %v3026 = vunpack.c.l.b16 %v2763
    %v3027 = vunpack.c.l.b16 %v2764
    %v3028 = vunpack.c.l.b16 %v2765
    %v3029 = vunpack.c.l.b16 %v2766
    %v3030 = vunpack.c.l.b16 %v2767
    %v3031 = vunpack.c.l.b16 %v2768
    %v3032 = vunpack.c.l.b16 %v2769
    %v3033 = vunpack.c.l.b16 %v2770
    %v3034 = vunpack.c.l.b16 %v2771
    %v3035 = vunpack.c.l.b16 %v2772
    %v3036 = vunpack.c.l.b16 %v2773
    %v3037 = vunpack.c.l.b16 %v2774
    %v3038 = vunpack.c.l.b16 %v2775
    %v3039 = vunpack.c.l.b16 %v2776
    %v3040 = vunpack.c.l.b16 %v2777
    %v3041 = vunpack.c.l.b16 %v2778
    %v3042 = vunpack.c.l.b16 %v2779
    %v3043 = vunpack.c.l.b16 %v2780
    %v3044 = vunpack.c.l.b16 %v2781
    %v3045 = vunpack.c.l.b16 %v2782
    %v3046 = vunpack.c.l.b16 %v2783
    %v3047 = vunpack.c.l.b16 %v2784
    %v3048 = vunpack.c.l.b16 %v2785
    %v3049 = vpack.c.b16 %v2922, %v2921
    %v3050 = vpack.c.b16 %v2924, %v2923
    %v3051 = vpack.c.b16 %v2926, %v2925
    %v3052 = vpack.c.b16 %v2928, %v2927
    %v3053 = vpack.c.b16 %v2930, %v2929
    %v3054 = vpack.c.b16 %v2932, %v2931
    %v3055 = vpack.c.b16 %v2934, %v2933
    %v3056 = vpack.c.b16 %v2936, %v2935
    %v3057 = vpack.c.b16 %v2938, %v2937
    %v3058 = vpack.c.b16 %v2940, %v2939
    %v3059 = vpack.c.b16 %v2942, %v2941
    %v3060 = vpack.c.b16 %v2944, %v2943
    %v3061 = vpack.c.b16 %v2946, %v2945
    %v3062 = vpack.c.b16 %v2948, %v2947
    %v3063 = vpack.c.b16 %v2950, %v2949
    %v3064 = vpack.c.b16 %v2952, %v2951
    %v3065 = vpack.c.b16 %v2954, %v2953
    %v3066 = vpack.c.b16 %v2956, %v2955
    %v3067 = vpack.c.b16 %v2958, %v2957
    %v3068 = vpack.c.b16 %v2960, %v2959
    %v3069 = vpack.c.b16 %v2962, %v2961
    %v3070 = vpack.c.b16 %v2964, %v2963
    %v3071 = vpack.c.b16 %v2966, %v2965
    %v3072 = vpack.c.b16 %v2968, %v2967
    %v3073 = vpack.c.b16 %v2970, %v2969
    %v3074 = vpack.c.b16 %v2972, %v2971
    %v3075 = vpack.c.b16 %v2974, %v2973
    %v3076 = vpack.c.b16 %v2976, %v2975
    %v3077 = vpack.c.b16 %v2978, %v2977
    %v3078 = vpack.c.b16 %v2980, %v2979
    %v3079 = vpack.c.b16 %v2982, %v2981
    %v3080 = vpack.c.b16 %v2984, %v2983
    %v3081 = vpack.c.b16 %v2986, %v2985
    %v3082 = vpack.c.b16 %v2988, %v2987
    %v3083 = vpack.c.b16 %v2990, %v2989
    %v3084 = vpack.c.b16 %v2992, %v2991
    %v3085 = vpack.c.b16 %v2994, %v2993
    %v3086 = vpack.c.b16 %v2996, %v2995
    %v3087 = vpack.c.b16 %v2998, %v2997
    %v3088 = vpack.c.b16 %v3000, %v2999
    %v3089 = vpack.c.b16 %v3002, %v3001
    %v3090 = vpack.c.b16 %v3004, %v3003
    %v3091 = vpack.c.b16 %v3006, %v3005
    %v3092 = vpack.c.b16 %v3008, %v3007
    %v3093 = vpack.c.b16 %v3010, %v3009
    %v3094 = vpack.c.b16 %v3012, %v3011
    %v3095 = vpack.c.b16 %v3014, %v3013
    %v3096 = vpack.c.b16 %v3016, %v3015
    %v3097 = vpack.c.b16 %v3018, %v3017
    %v3098 = vpack.c.b16 %v3020, %v3019
    %v3099 = vpack.c.b16 %v3022, %v3021
    %v3100 = vpack.c.b16 %v3024, %v3023
    %v3101 = vpack.c.b16 %v3026, %v3025
    %v3102 = vpack.c.b16 %v3028, %v3027
    %v3103 = vpack.c.b16 %v3030, %v3029
    %v3104 = vpack.c.b16 %v3032, %v3031
    %v3105 = vpack.c.b16 %v3034, %v3033
    %v3106 = vpack.c.b16 %v3036, %v3035
    %v3107 = vpack.c.b16 %v3038, %v3037
    %v3108 = vpack.c.b16 %v3040, %v3039
    %v3109 = vpack.c.b16 %v3042, %v3041
    %v3110 = vpack.c.b16 %v3044, %v3043
    %v3111 = vpack.c.b16 %v3046, %v3045
    %v3112 = vpack.c.b16 %v3048, %v3047
    %3177 = vmatprep.subr.bf16.mxu0 0
    %3178 = vmatpush1.bf16.msra.mxu0 %v3049
    %3179 = vmatprep.subr.bf16.mxu0 0
    %3180 = vmatpush1.bf16.msra.mxu0 %v3050
    %3181 = vmatprep.subr.bf16.mxu0 0
    %3182 = vmatpush1.bf16.msra.mxu0 %v3051
    %3183 = vmatprep.subr.bf16.mxu0 0
    %3184 = vmatpush1.bf16.msra.mxu0 %v3052
    %3185 = vmatprep.subr.bf16.mxu0 0
    %3186 = vmatpush1.bf16.msra.mxu0 %v3053
    %3187 = vmatprep.subr.bf16.mxu0 0
    %3188 = vmatpush1.bf16.msra.mxu0 %v3054
    %3189 = vmatprep.subr.bf16.mxu0 0
    %3190 = vmatpush1.bf16.msra.mxu0 %v3055
    %3191 = vmatprep.subr.bf16.mxu0 0
    %3192 = vmatpush1.bf16.msra.mxu0 %v3056
    %3193 = vmatprep.subr.bf16.mxu0 0
    %3194 = vmatpush1.bf16.msra.mxu0 %v3057
    %3195 = vmatprep.subr.bf16.mxu0 0
    %3196 = vmatpush1.bf16.msra.mxu0 %v3058
    %3197 = vmatprep.subr.bf16.mxu0 0
    %3198 = vmatpush1.bf16.msra.mxu0 %v3059
    %3199 = vmatprep.subr.bf16.mxu0 0
    %3200 = vmatpush1.bf16.msra.mxu0 %v3060
    %3201 = vmatprep.subr.bf16.mxu0 0
    %3202 = vmatpush1.bf16.msra.mxu0 %v3061
    %3203 = vmatprep.subr.bf16.mxu0 0
    %3204 = vmatpush1.bf16.msra.mxu0 %v3062
    %3205 = vmatprep.subr.bf16.mxu0 0
    %3206 = vmatpush1.bf16.msra.mxu0 %v3063
    %3207 = vmatprep.subr.bf16.mxu0 0
    %3208 = vmatpush1.bf16.msra.mxu0 %v3064
    %3209 = vmatprep.mubr.bf16.mxu0 %v2651
    %3210 = vmatmul.mubr.bf16.gmra.mrb[0].mxu0 %v2650
    %v3211 = vpop.f32.mrb[0].mxu0
    %v3212 = vadd.f32 %v2791, %v3211
    %v3213 = vpop.f32.mrb[0].mxu0
    %v3214 = vpop.f32.mrb[0].mxu0
    %v3215 = vadd.f32 %v2791, %v3214
    %v3216 = vpop.f32.mrb[0].mxu0
    %3217 = vdwg.mxu0
    %3218 = vmatprep.subr.bf16.mxu0 0
    %3219 = vmatpush1.bf16.msra.mxu0 %v3065
    %3220 = vmatprep.subr.bf16.mxu0 0
    %3221 = vmatpush1.bf16.msra.mxu0 %v3066
    %3222 = vmatprep.subr.bf16.mxu0 0
    %3223 = vmatpush1.bf16.msra.mxu0 %v3067
    %3224 = vmatprep.subr.bf16.mxu0 0
    %3225 = vmatpush1.bf16.msra.mxu0 %v3068
    %3226 = vmatprep.subr.bf16.mxu0 0
    %3227 = vmatpush1.bf16.msra.mxu0 %v3069
    %3228 = vmatprep.subr.bf16.mxu0 0
    %3229 = vmatpush1.bf16.msra.mxu0 %v3070
    %3230 = vmatprep.subr.bf16.mxu0 0
    %3231 = vmatpush1.bf16.msra.mxu0 %v3071
    %3232 = vmatprep.subr.bf16.mxu0 0
    %3233 = vmatpush1.bf16.msra.mxu0 %v3072
    %3234 = vmatprep.subr.bf16.mxu0 0
    %3235 = vmatpush1.bf16.msra.mxu0 %v3073
    %3236 = vmatprep.subr.bf16.mxu0 0
    %3237 = vmatpush1.bf16.msra.mxu0 %v3074
    %3238 = vmatprep.subr.bf16.mxu0 0
    %3239 = vmatpush1.bf16.msra.mxu0 %v3075
    %3240 = vmatprep.subr.bf16.mxu0 0
    %3241 = vmatpush1.bf16.msra.mxu0 %v3076
    %3242 = vmatprep.subr.bf16.mxu0 0
    %3243 = vmatpush1.bf16.msra.mxu0 %v3077
    %3244 = vmatprep.subr.bf16.mxu0 0
    %3245 = vmatpush1.bf16.msra.mxu0 %v3078
    %3246 = vmatprep.subr.bf16.mxu0 0
    %3247 = vmatpush1.bf16.msra.mxu0 %v3079
    %3248 = vmatprep.subr.bf16.mxu0 0
    %3249 = vmatpush1.bf16.msra.mxu0 %v3080
    %3250 = vmatprep.mubr.bf16.mxu0 %v2653
    %3251 = vmatmul.mubr.bf16.gmra.mrb[0].mxu0 %v2652
    %v3252 = vpop.f32.mrb[0].mxu0
    %v3253 = vadd.f32 %v3212, %v3252
    %v3254 = vpop.f32.mrb[0].mxu0
    %v3255 = vpop.f32.mrb[0].mxu0
    %v3256 = vadd.f32 %v3215, %v3255
    %v3257 = vpop.f32.mrb[0].mxu0
    %3258 = vdwg.mxu0
    %3259 = vmatprep.subr.bf16.mxu0 0
    %3260 = vmatpush1.bf16.msra.mxu0 %v3081
    %3261 = vmatprep.subr.bf16.mxu0 0
    %3262 = vmatpush1.bf16.msra.mxu0 %v3082
    %3263 = vmatprep.subr.bf16.mxu0 0
    %3264 = vmatpush1.bf16.msra.mxu0 %v3083
    %3265 = vmatprep.subr.bf16.mxu0 0
    %3266 = vmatpush1.bf16.msra.mxu0 %v3084
    %3267 = vmatprep.subr.bf16.mxu0 0
    %3268 = vmatpush1.bf16.msra.mxu0 %v3085
    %3269 = vmatprep.subr.bf16.mxu0 0
    %3270 = vmatpush1.bf16.msra.mxu0 %v3086
    %3271 = vmatprep.subr.bf16.mxu0 0
    %3272 = vmatpush1.bf16.msra.mxu0 %v3087
    %3273 = vmatprep.subr.bf16.mxu0 0
    %3274 = vmatpush1.bf16.msra.mxu0 %v3088
    %3275 = vmatprep.subr.bf16.mxu0 0
    %3276 = vmatpush1.bf16.msra.mxu0 %v3089
    %3277 = vmatprep.subr.bf16.mxu0 0
    %3278 = vmatpush1.bf16.msra.mxu0 %v3090
    %3279 = vmatprep.subr.bf16.mxu0 0
    %3280 = vmatpush1.bf16.msra.mxu0 %v3091
    %3281 = vmatprep.subr.bf16.mxu0 0
    %3282 = vmatpush1.bf16.msra.mxu0 %v3092
    %3283 = vmatprep.subr.bf16.mxu0 0
    %3284 = vmatpush1.bf16.msra.mxu0 %v3093
    %3285 = vmatprep.subr.bf16.mxu0 0
    %3286 = vmatpush1.bf16.msra.mxu0 %v3094
    %3287 = vmatprep.subr.bf16.mxu0 0
    %3288 = vmatpush1.bf16.msra.mxu0 %v3095
    %3289 = vmatprep.subr.bf16.mxu0 0
    %3290 = vmatpush1.bf16.msra.mxu0 %v3096
    %3291 = vmatprep.mubr.bf16.mxu0 %v2655
    %3292 = vmatmul.mubr.bf16.gmra.mrb[0].mxu0 %v2654
    %v3293 = vpop.f32.mrb[0].mxu0
    %v3294 = vadd.f32 %v3253, %v3293
    %v3295 = vpop.f32.mrb[0].mxu0
    %v3296 = vpop.f32.mrb[0].mxu0
    %v3297 = vadd.f32 %v3256, %v3296
    %v3298 = vpop.f32.mrb[0].mxu0
    %3299 = vdwg.mxu0
    %3300 = vmatprep.subr.bf16.mxu0 0
    %3301 = vmatpush1.bf16.msra.mxu0 %v3097
    %3302 = vmatprep.subr.bf16.mxu0 0
    %3303 = vmatpush1.bf16.msra.mxu0 %v3098
    %3304 = vmatprep.subr.bf16.mxu0 0
    %3305 = vmatpush1.bf16.msra.mxu0 %v3099
    %3306 = vmatprep.subr.bf16.mxu0 0
    %3307 = vmatpush1.bf16.msra.mxu0 %v3100
    %3308 = vmatprep.subr.bf16.mxu0 0
    %3309 = vmatpush1.bf16.msra.mxu0 %v3101
    %3310 = vmatprep.subr.bf16.mxu0 0
    %3311 = vmatpush1.bf16.msra.mxu0 %v3102
    %3312 = vmatprep.subr.bf16.mxu0 0
    %3313 = vmatpush1.bf16.msra.mxu0 %v3103
    %3314 = vmatprep.subr.bf16.mxu0 0
    %3315 = vmatpush1.bf16.msra.mxu0 %v3104
    %3316 = vmatprep.subr.bf16.mxu0 0
    %3317 = vmatpush1.bf16.msra.mxu0 %v3105
    %3318 = vmatprep.subr.bf16.mxu0 0
    %3319 = vmatpush1.bf16.msra.mxu0 %v3106
    %3320 = vmatprep.subr.bf16.mxu0 0
    %3321 = vmatpush1.bf16.msra.mxu0 %v3107
    %3322 = vmatprep.subr.bf16.mxu0 0
    %3323 = vmatpush1.bf16.msra.mxu0 %v3108
    %3324 = vmatprep.subr.bf16.mxu0 0
    %3325 = vmatpush1.bf16.msra.mxu0 %v3109
    %3326 = vmatprep.subr.bf16.mxu0 0
    %3327 = vmatpush1.bf16.msra.mxu0 %v3110
    %3328 = vmatprep.subr.bf16.mxu0 0
    %3329 = vmatpush1.bf16.msra.mxu0 %v3111
    %3330 = vmatprep.subr.bf16.mxu0 0
    %3331 = vmatpush1.bf16.msra.mxu0 %v3112
    %3332 = vmatprep.mubr.bf16.mxu0 %v2657
    %3333 = vmatmul.mubr.bf16.gmra.mrb[0].mxu0 %v2656
    %v3334 = vpop.f32.mrb[0].mxu0
    %v3335 = vadd.f32 %v3294, %v3334
    %v3336 = vpop.f32.mrb[0].mxu0
    %v3337 = vpop.f32.mrb[0].mxu0
    %v3338 = vadd.f32 %v3297, %v3337
    %v3339 = vpop.f32.mrb[0].mxu0
    %3340 = vdwg.mxu0
    %v3341 = vtanh.pop %v3335
    %v3342 = vtanh.pop %v3338
    %3343 = vst [vmem:[#allocation11] sm:$0xff] %v3341
    %3344 = vst [vmem:[#allocation11 + $0x8] sm:$0xff] %v3342
    // Predicated region
    $region58: #{tpu_custom_call.1} parent=1 // pred_check
      _
    $region59: #{tpu_custom_call.1} parent=1 // pred_check_branch
      %3346 = sbr.rel (0) target = $region61
    $region60: #{tpu_custom_call.1} parent=1 // pred_region
      %s3348 = ssub.s32 256, 256
      %3349 = vsyncadd [#allocation4], %s3348
      %s3350 = sshll.u32 [#allocation11], 4
      %s3351 = int_to_ptr.vmem [resolvable:$true] %s3350
      %3356 = dma.vmem_to_hbm [thread:$0]  %s3351, 256, %s9, [#allocation4], 128, 128, 8
    $region61: #{tpu_custom_call.1} parent=1 // pred_fallthru
      _
    // Predicated region
    $region62: #{tpu_custom_call.1} parent=1 // pred_check
      _
    $region63: #{tpu_custom_call.1} parent=1 // pred_check_branch
      %3358 = sbr.rel (0) target = $region65
    $region64: #{tpu_custom_call.1} parent=1 // pred_region
      %3359 = dma.done [#allocation4], 256
    $region65: #{tpu_custom_call.1} parent=1 // pred_fallthru
      _
    %3360 = vsyncpa [#allocation3], 1
    %3361 = vsyncpa [#allocation6], 1
    %3362 = vsyncpa [#allocation9], 1
    %3363 = vsyncpa [#allocation4], 1

</llo_original>
